<compile_context>
chip_gen: v7x
topology: tpu7x:2x2x1
jax: 0.10.0
libtpu: 0.0.40
codegen_flags: <defaults>
</compile_context>

<pallas_src>
import functools

import jax
import jax.numpy as jnp
from jax.experimental import pallas as pl
from jax.experimental.pallas import tpu as pltpu


def _round_up(x, m):
    return ((x + m - 1) // m) * m


def _i2p_backbone_kernel(x_ref, wc_ref, bc_ref, wf_ref, bf_ref, mask_ref,
                         attr_ref, pool_ref, *, Wp, L_out, Cfp):
    """One batch element: 3x3 conv (9 shifted matmuls) -> ReLU -> GAP -> FC."""
    x = x_ref[0]                                     # (Cin, Lpad) bf16

    # 3x3 conv as 9 shifted lane-slices x (Cfp, Cin) MXU matmuls (im2col in
    # VMEM, not in HBM).  Output positions are q = h*Wp + w over the *padded*
    # width; the 2 padded columns per row produce garbage that the GAP mask
    # removes below.
    acc = jnp.zeros((Cfp, L_out), jnp.float32)
    for t in range(9):
        i, j = divmod(t, 3)
        s = i * Wp + j                               # static tap offset
        xs = x[:, s:s + L_out]                       # (Cin, L_out) bf16
        acc = acc + jnp.dot(wc_ref[t], xs, preferred_element_type=jnp.float32)

    feat = jnp.maximum(acc + bc_ref[...], 0.0)       # f32 bias + ReLU (VPU)

    # Global average pool over valid pixels; mask_ref already holds 1/(H*W)
    # on valid columns and 0 on the padded ones.
    pooled = jnp.sum(feat * mask_ref[...], axis=1, keepdims=True)   # (Cfp, 1)
    pool_ref[0] = pooled

    # FC head fully in f32 (no extra bf16 rounding of the pooled vector).
    attr_ref[0] = (jnp.dot(wf_ref[...], pooled,
                           preferred_element_type=jnp.float32) + bf_ref[...])


def i2p_forward(x_nchw, target, params):
    """Mirrors I2P.forward(input, target) -> (_3D_attr, _3D_attr_GT, avgpool)."""
    wc, bc, wf, bf = params
    B, Cin, H, W = x_nchw.shape
    K, Cf = wc.shape
    D = wf.shape[1]
    assert K == 9 * Cin, "conv weight must be in 3x3 im2col layout (9*Cin, Cf)"

    Hp, Wp = H + 2, W + 2
    L_out = H * Wp                       # conv output positions (padded-width coords)
    Cfp = _round_up(Cf, 8)
    Dp = _round_up(D, 8)
    # Largest flat input index touched by tap (2,2) is (L_out - 1) + 2*Wp + 2.
    Lpad = _round_up(max(Hp * Wp, L_out + 2 * Wp + 2), 128)

    # ---- glue (fused by jit): spatial zero-pad, flatten, cast to bf16 ----
    # NCHW is already channels-first, so no transpose is needed.
    xp = jnp.pad(x_nchw.astype(jnp.float32), ((0, 0), (0, 0), (1, 1), (1, 1)))
    xflat = xp.reshape(B, Cin, Hp * Wp)
    xflat = jnp.pad(xflat, ((0, 0), (0, 0), (0, Lpad - Hp * Wp))).astype(jnp.bfloat16)

    # Weights: per-tap (Cfp, Cin) bf16 for the conv; FC head kept in f32.
    wc9 = wc.reshape(9, Cin, Cf).transpose(0, 2, 1)                  # (9, Cf, Cin)
    wc9 = jnp.pad(wc9, ((0, 0), (0, Cfp - Cf), (0, 0))).astype(jnp.bfloat16)
    bc_c = jnp.pad(bc.reshape(Cf, 1), ((0, Cfp - Cf), (0, 0))).astype(jnp.float32)
    wfT = jnp.pad(wf.T, ((0, Dp - D), (0, Cfp - Cf))).astype(jnp.float32)
    bf_c = jnp.pad(bf.reshape(D, 1), ((0, Dp - D), (0, 0))).astype(jnp.float32)

    # GAP mask over padded-width output positions (also carries the 1/HW scale).
    col_in_row = jnp.arange(L_out, dtype=jnp.int32) % Wp
    gap_mask = ((col_in_row < W).astype(jnp.float32) / float(H * W)).reshape(1, L_out)

    # VMEM budget, sized against v7x's 64 MiB (not v5e/v6e's 128 MiB).
    x_block = Cin * Lpad * 2
    w_bytes = 9 * Cfp * Cin * 2 + Cfp * 4 + Dp * Cfp * 4 + Dp * 4 + L_out * 4
    out_bytes = (Dp + Cfp) * 4
    interm = 4 * Cfp * L_out * 4                      # acc / feat / temporaries
    vmem_need = 2 * x_block + 2 * w_bytes + 2 * out_bytes + interm
    # TODO(synk): for images where vmem_need approaches ~48 MiB, switch to a
    # row-tiled halo path (memory_space=pl.ANY + make_async_copy double buffer).
    assert vmem_need < (48 << 20), "image too large for whole-image-per-step path"
    vmem_limit = int(min(64 << 20, max(16 << 20, 2 * vmem_need)))

    cost = pl.CostEstimate(
        flops=B * (2 * 9 * Cfp * Cin * L_out + 2 * Dp * Cfp),
        transcendentals=0,
        bytes_accessed=B * x_block + w_bytes + B * out_bytes,
    )

    kernel = functools.partial(_i2p_backbone_kernel, Wp=Wp, L_out=L_out, Cfp=Cfp)

    grid_spec = pltpu.PrefetchScalarGridSpec(
        num_scalar_prefetch=0,
        grid=(B,),
        in_specs=[
            pl.BlockSpec((1, Cin, Lpad), lambda b: (b, 0, 0)),   # image slab
            pl.BlockSpec((9, Cfp, Cin), lambda b: (0, 0, 0)),    # conv taps
            pl.BlockSpec((Cfp, 1), lambda b: (0, 0)),            # conv bias
            pl.BlockSpec((Dp, Cfp), lambda b: (0, 0)),           # fc weight (T)
            pl.BlockSpec((Dp, 1), lambda b: (0, 0)),             # fc bias
            pl.BlockSpec((1, L_out), lambda b: (0, 0)),          # GAP mask
        ],
        out_specs=(
            pl.BlockSpec((1, Dp, 1), lambda b: (b, 0, 0)),
            pl.BlockSpec((1, Cfp, 1), lambda b: (b, 0, 0)),
        ),
    )

    attr_p, pool_p = pl.pallas_call(
        kernel,
        out_shape=(jax.ShapeDtypeStruct((B, Dp, 1), jnp.float32),
                   jax.ShapeDtypeStruct((B, Cfp, 1), jnp.float32)),
        grid_spec=grid_spec,
        compiler_params=pltpu.CompilerParams(
            # Batch is the parallel axis (v7x megacore splits it).
            # TODO(synk): with B == 1 on v7x, split the spatial work across the
            # two TensorCores (core_map / core_parallel) instead.
            dimension_semantics=("parallel",),
            vmem_limit_bytes=vmem_limit,
        ),
        cost_estimate=cost,
    )(xflat, wc9, bc_c, wfT, bf_c, gap_mask)

    attr = attr_p[:, :D, 0]
    pooled = pool_p[:, :Cf, 0]

    # forward(): _3D_attr_GT = target.type(FloatTensor)  (plain dtype cast, glue)
    attr_gt = target.astype(jnp.float32)
    return attr, attr_gt, pooled


def init_params(key, cin=4, cf=32, d=62):
    k1, k2, k3, k4 = jax.random.split(key, 4)
    wc = 0.1 * jax.random.normal(k1, (9 * cin, cf), jnp.float32)   # conv weight (im2col layout)
    bc = 0.01 * jax.random.normal(k2, (1, cf), jnp.float32)        # conv bias
    wf = 0.1 * jax.random.normal(k3, (cf, d), jnp.float32)         # fc weight
    bf = 0.01 * jax.random.normal(k4, (1, d), jnp.float32)         # fc bias
    return wc, bc, wf, bf


def _reference_forward(x_nchw, params):
    """Pure-JAX f32 reference of the synthetic backbone (for correctness check)."""
    wc, bc, wf, bf = params
    B, Cin, H, W = x_nchw.shape
    x = jnp.transpose(x_nchw, (0, 2, 3, 1)).astype(jnp.float32)
    xp = jnp.pad(x, ((0, 0), (1, 1), (1, 1), (0, 0)))
    taps = [xp[:, i:i + H, j:j + W, :] for i in range(3) for j in range(3)]
    patches = jnp.stack(taps, axis=3).reshape(B, H * W, 9 * Cin)
    feat = jnp.maximum(jnp.einsum('bpk,kc->bpc', patches, wc) + bc[None], 0.0)
    pooled = jnp.mean(feat, axis=1)
    attr = pooled @ wf + bf
    return attr, pooled


if __name__ == "__main__":
    key = jax.random.PRNGKey(0)
    kx, kt, kp = jax.random.split(key, 3)

    B, Cin, H, W = 2, 4, 16, 16
    D = 62   # 3DMM parameter dim (12 pose + 40 shape + 10 exp)
    Cf = 32

    x = jax.random.normal(kx, (B, Cin, H, W), jnp.float32)          # NCHW like PyTorch
    target = jax.random.normal(kt, (B, D), jnp.float32)             # _3D_attr ground truth
    params = init_params(kp, cin=Cin, cf=Cf, d=D)

    # TODO(synk): the real mobilenet/resnet/ghostnet backbones are not reproduced;
    # this uses a representative conv->ReLU->GAP->FC backbone with identical I/O.
    fwd = jax.jit(i2p_forward)
    attr, attr_gt, avgpool = fwd(x, target, params)
    jax.block_until_ready((attr, attr_gt, avgpool))

    assert attr.shape == (B, D) and attr.dtype == jnp.float32
    assert attr_gt.shape == (B, D) and attr_gt.dtype == jnp.float32
    assert avgpool.shape == (B, Cf) and avgpool.dtype == jnp.float32

    # Correctness vs pure-JAX f32 reference (loose tol: bf16 MXU operands).
    ref_attr, ref_pool = _reference_forward(x, params)
    assert float(jnp.max(jnp.abs(attr - ref_attr))) < 2e-2
    assert float(jnp.max(jnp.abs(avgpool - ref_pool))) < 2e-2
    assert float(jnp.max(jnp.abs(attr_gt - target))) == 0.0

    print("KERNEL_OK")
</pallas_src>

<mosaic_0001>
module attributes {stable_mosaic.version = 11 : i64} {
  func.func @_i2p_backbone_kernel(%arg0: i32, %arg1: memref<1x4x384xbf16, #tpu.memory_space<vmem>>, %arg2: memref<9x32x4xbf16, #tpu.memory_space<vmem>>, %arg3: memref<32x1xf32, #tpu.memory_space<vmem>>, %arg4: memref<64x32xf32, #tpu.memory_space<vmem>>, %arg5: memref<64x1xf32, #tpu.memory_space<vmem>>, %arg6: memref<1x288xf32, #tpu.memory_space<vmem>>, %arg7: memref<1x64x1xf32, #tpu.memory_space<vmem>>, %arg8: memref<1x32x1xf32, #tpu.memory_space<vmem>>) attributes {dimension_semantics = [#tpu.dimension_semantics<parallel>], iteration_bounds = array<i64: 2>, scalar_prefetch = 0 : i64, scratch_operands = 0 : i64, tpu.core_type = #tpu.core_type<tc>, window_params = [{transform_indices = @transform_0, window_bounds = array<i64: 1, 4, 384>}, {pipeline_mode = #tpu.pipeline_mode<synchronous>, transform_indices = @transform_1, window_bounds = array<i64: 9, 32, 4>}, {pipeline_mode = #tpu.pipeline_mode<synchronous>, transform_indices = @transform_2, window_bounds = array<i64: 32, 1>}, {pipeline_mode = #tpu.pipeline_mode<synchronous>, transform_indices = @transform_3, window_bounds = array<i64: 64, 32>}, {pipeline_mode = #tpu.pipeline_mode<synchronous>, transform_indices = @transform_4, window_bounds = array<i64: 64, 1>}, {pipeline_mode = #tpu.pipeline_mode<synchronous>, transform_indices = @transform_5, window_bounds = array<i64: 1, 288>}, {transform_indices = @transform_6, window_bounds = array<i64: 1, 64, 1>}, {transform_indices = @transform_7, window_bounds = array<i64: 1, 32, 1>}]} {
    %c0 = arith.constant 0 : index
    %c0_0 = arith.constant 0 : index
    %c0_1 = arith.constant 0 : index
    %0 = vector.load %arg1[%c0, %c0_0, %c0_1] : memref<1x4x384xbf16, #tpu.memory_space<vmem>>, vector<1x4x384xbf16>
    %1 = vector.shape_cast %0 : vector<1x4x384xbf16> to vector<4x384xbf16>
    %cst = arith.constant 0.000000e+00 : f32
    %2 = vector.broadcast %cst : f32 to vector<32x288xf32>
    %3 = vector.extract_strided_slice %1 {offsets = [0, 0], sizes = [4, 288], strides = [1, 1]} : vector<4x384xbf16> to vector<4x288xbf16>
    %c0_2 = arith.constant 0 : index
    %c0_3 = arith.constant 0 : index
    %c0_4 = arith.constant 0 : index
    %4 = vector.load %arg2[%c0_2, %c0_3, %c0_4] : memref<9x32x4xbf16, #tpu.memory_space<vmem>>, vector<1x32x4xbf16>
    %5 = vector.shape_cast %4 : vector<1x32x4xbf16> to vector<32x4xbf16>
    %cst_5 = arith.constant dense<0.000000e+00> : vector<32x288xf32>
    %6 = tpu.matmul %5, %3, %cst_5 {dimension_numbers = #tpu.dot_dimension_numbers<[1], [0], [0], [1], [0, 0, 1, 1], [], []>} : vector<32x4xbf16>, vector<4x288xbf16>, vector<32x288xf32> -> vector<32x288xf32>
    %7 = arith.addf %2, %6 : vector<32x288xf32>
    %8 = vector.extract_strided_slice %1 {offsets = [0, 1], sizes = [4, 288], strides = [1, 1]} : vector<4x384xbf16> to vector<4x288xbf16>
    %c1 = arith.constant 1 : index
    %c0_6 = arith.constant 0 : index
    %c0_7 = arith.constant 0 : index
    %9 = vector.load %arg2[%c1, %c0_6, %c0_7] : memref<9x32x4xbf16, #tpu.memory_space<vmem>>, vector<1x32x4xbf16>
    %10 = vector.shape_cast %9 : vector<1x32x4xbf16> to vector<32x4xbf16>
    %cst_8 = arith.constant dense<0.000000e+00> : vector<32x288xf32>
    %11 = tpu.matmul %10, %8, %cst_8 {dimension_numbers = #tpu.dot_dimension_numbers<[1], [0], [0], [1], [0, 0, 1, 1], [], []>} : vector<32x4xbf16>, vector<4x288xbf16>, vector<32x288xf32> -> vector<32x288xf32>
    %12 = arith.addf %7, %11 : vector<32x288xf32>
    %13 = vector.extract_strided_slice %1 {offsets = [0, 2], sizes = [4, 288], strides = [1, 1]} : vector<4x384xbf16> to vector<4x288xbf16>
    %c2 = arith.constant 2 : index
    %c0_9 = arith.constant 0 : index
    %c0_10 = arith.constant 0 : index
    %14 = vector.load %arg2[%c2, %c0_9, %c0_10] : memref<9x32x4xbf16, #tpu.memory_space<vmem>>, vector<1x32x4xbf16>
    %15 = vector.shape_cast %14 : vector<1x32x4xbf16> to vector<32x4xbf16>
    %cst_11 = arith.constant dense<0.000000e+00> : vector<32x288xf32>
    %16 = tpu.matmul %15, %13, %cst_11 {dimension_numbers = #tpu.dot_dimension_numbers<[1], [0], [0], [1], [0, 0, 1, 1], [], []>} : vector<32x4xbf16>, vector<4x288xbf16>, vector<32x288xf32> -> vector<32x288xf32>
    %17 = arith.addf %12, %16 : vector<32x288xf32>
    %18 = vector.extract_strided_slice %1 {offsets = [0, 18], sizes = [4, 288], strides = [1, 1]} : vector<4x384xbf16> to vector<4x288xbf16>
    %c3 = arith.constant 3 : index
    %c0_12 = arith.constant 0 : index
    %c0_13 = arith.constant 0 : index
    %19 = vector.load %arg2[%c3, %c0_12, %c0_13] : memref<9x32x4xbf16, #tpu.memory_space<vmem>>, vector<1x32x4xbf16>
    %20 = vector.shape_cast %19 : vector<1x32x4xbf16> to vector<32x4xbf16>
    %cst_14 = arith.constant dense<0.000000e+00> : vector<32x288xf32>
    %21 = tpu.matmul %20, %18, %cst_14 {dimension_numbers = #tpu.dot_dimension_numbers<[1], [0], [0], [1], [0, 0, 1, 1], [], []>} : vector<32x4xbf16>, vector<4x288xbf16>, vector<32x288xf32> -> vector<32x288xf32>
    %22 = arith.addf %17, %21 : vector<32x288xf32>
    %23 = vector.extract_strided_slice %1 {offsets = [0, 19], sizes = [4, 288], strides = [1, 1]} : vector<4x384xbf16> to vector<4x288xbf16>
    %c4 = arith.constant 4 : index
    %c0_15 = arith.constant 0 : index
    %c0_16 = arith.constant 0 : index
    %24 = vector.load %arg2[%c4, %c0_15, %c0_16] : memref<9x32x4xbf16, #tpu.memory_space<vmem>>, vector<1x32x4xbf16>
    %25 = vector.shape_cast %24 : vector<1x32x4xbf16> to vector<32x4xbf16>
    %cst_17 = arith.constant dense<0.000000e+00> : vector<32x288xf32>
    %26 = tpu.matmul %25, %23, %cst_17 {dimension_numbers = #tpu.dot_dimension_numbers<[1], [0], [0], [1], [0, 0, 1, 1], [], []>} : vector<32x4xbf16>, vector<4x288xbf16>, vector<32x288xf32> -> vector<32x288xf32>
    %27 = arith.addf %22, %26 : vector<32x288xf32>
    %28 = vector.extract_strided_slice %1 {offsets = [0, 20], sizes = [4, 288], strides = [1, 1]} : vector<4x384xbf16> to vector<4x288xbf16>
    %c5 = arith.constant 5 : index
    %c0_18 = arith.constant 0 : index
    %c0_19 = arith.constant 0 : index
    %29 = vector.load %arg2[%c5, %c0_18, %c0_19] : memref<9x32x4xbf16, #tpu.memory_space<vmem>>, vector<1x32x4xbf16>
    %30 = vector.shape_cast %29 : vector<1x32x4xbf16> to vector<32x4xbf16>
    %cst_20 = arith.constant dense<0.000000e+00> : vector<32x288xf32>
    %31 = tpu.matmul %30, %28, %cst_20 {dimension_numbers = #tpu.dot_dimension_numbers<[1], [0], [0], [1], [0, 0, 1, 1], [], []>} : vector<32x4xbf16>, vector<4x288xbf16>, vector<32x288xf32> -> vector<32x288xf32>
    %32 = arith.addf %27, %31 : vector<32x288xf32>
    %33 = vector.extract_strided_slice %1 {offsets = [0, 36], sizes = [4, 288], strides = [1, 1]} : vector<4x384xbf16> to vector<4x288xbf16>
    %c6 = arith.constant 6 : index
    %c0_21 = arith.constant 0 : index
    %c0_22 = arith.constant 0 : index
    %34 = vector.load %arg2[%c6, %c0_21, %c0_22] : memref<9x32x4xbf16, #tpu.memory_space<vmem>>, vector<1x32x4xbf16>
    %35 = vector.shape_cast %34 : vector<1x32x4xbf16> to vector<32x4xbf16>
    %cst_23 = arith.constant dense<0.000000e+00> : vector<32x288xf32>
    %36 = tpu.matmul %35, %33, %cst_23 {dimension_numbers = #tpu.dot_dimension_numbers<[1], [0], [0], [1], [0, 0, 1, 1], [], []>} : vector<32x4xbf16>, vector<4x288xbf16>, vector<32x288xf32> -> vector<32x288xf32>
    %37 = arith.addf %32, %36 : vector<32x288xf32>
    %38 = vector.extract_strided_slice %1 {offsets = [0, 37], sizes = [4, 288], strides = [1, 1]} : vector<4x384xbf16> to vector<4x288xbf16>
    %c7 = arith.constant 7 : index
    %c0_24 = arith.constant 0 : index
    %c0_25 = arith.constant 0 : index
    %39 = vector.load %arg2[%c7, %c0_24, %c0_25] : memref<9x32x4xbf16, #tpu.memory_space<vmem>>, vector<1x32x4xbf16>
    %40 = vector.shape_cast %39 : vector<1x32x4xbf16> to vector<32x4xbf16>
    %cst_26 = arith.constant dense<0.000000e+00> : vector<32x288xf32>
    %41 = tpu.matmul %40, %38, %cst_26 {dimension_numbers = #tpu.dot_dimension_numbers<[1], [0], [0], [1], [0, 0, 1, 1], [], []>} : vector<32x4xbf16>, vector<4x288xbf16>, vector<32x288xf32> -> vector<32x288xf32>
    %42 = arith.addf %37, %41 : vector<32x288xf32>
    %43 = vector.extract_strided_slice %1 {offsets = [0, 38], sizes = [4, 288], strides = [1, 1]} : vector<4x384xbf16> to vector<4x288xbf16>
    %c8 = arith.constant 8 : index
    %c0_27 = arith.constant 0 : index
    %c0_28 = arith.constant 0 : index
    %44 = vector.load %arg2[%c8, %c0_27, %c0_28] : memref<9x32x4xbf16, #tpu.memory_space<vmem>>, vector<1x32x4xbf16>
    %45 = vector.shape_cast %44 : vector<1x32x4xbf16> to vector<32x4xbf16>
    %cst_29 = arith.constant dense<0.000000e+00> : vector<32x288xf32>
    %46 = tpu.matmul %45, %43, %cst_29 {dimension_numbers = #tpu.dot_dimension_numbers<[1], [0], [0], [1], [0, 0, 1, 1], [], []>} : vector<32x4xbf16>, vector<4x288xbf16>, vector<32x288xf32> -> vector<32x288xf32>
    %47 = arith.addf %42, %46 : vector<32x288xf32>
    %c0_30 = arith.constant 0 : index
    %c0_31 = arith.constant 0 : index
    %48 = vector.load %arg3[%c0_30, %c0_31] : memref<32x1xf32, #tpu.memory_space<vmem>>, vector<32x1xf32>
    %49 = vector.broadcast %48 : vector<32x1xf32> to vector<32x288xf32>
    %50 = arith.addf %47, %49 : vector<32x288xf32>
    %cst_32 = arith.constant 0.000000e+00 : f32
    %51 = vector.broadcast %cst_32 : f32 to vector<32x288xf32>
    %52 = arith.maximumf %50, %51 : vector<32x288xf32>
    %c0_33 = arith.constant 0 : index
    %c0_34 = arith.constant 0 : index
    %53 = vector.load %arg6[%c0_33, %c0_34] : memref<1x288xf32, #tpu.memory_space<vmem>>, vector<1x288xf32>
    %54 = vector.broadcast %53 : vector<1x288xf32> to vector<32x288xf32>
    %55 = arith.mulf %52, %54 : vector<32x288xf32>
    %cst_35 = arith.constant dense<0.000000e+00> : vector<32xf32>
    %56 = vector.multi_reduction <add>, %55, %cst_35 [1] : vector<32x288xf32> to vector<32xf32>
    %57 = vector.shape_cast %56 : vector<32xf32> to vector<32x1xf32>
    %c0_36 = arith.constant 0 : index
    %c0_37 = arith.constant 0 : index
    %c0_38 = arith.constant 0 : index
    %58 = vector.load %arg8[%c0_36, %c0_37, %c0_38] : memref<1x32x1xf32, #tpu.memory_space<vmem>>, vector<1x32x1xf32>
    %59 = vector.shape_cast %58 : vector<1x32x1xf32> to vector<32x1xf32>
    %60 = vector.shape_cast %57 : vector<32x1xf32> to vector<1x32x1xf32>
    tpu.vector_store %arg8[%c0_36, %c0_37, %c0_38], %60 {strides = array<i32>} : memref<1x32x1xf32, #tpu.memory_space<vmem>>, vector<1x32x1xf32>,
    %c0_39 = arith.constant 0 : index
    %c0_40 = arith.constant 0 : index
    %61 = vector.load %arg4[%c0_39, %c0_40] : memref<64x32xf32, #tpu.memory_space<vmem>>, vector<64x32xf32>
    %cst_41 = arith.constant dense<0.000000e+00> : vector<64x1xf32>
    %62 = tpu.matmul %61, %57, %cst_41 {dimension_numbers = #tpu.dot_dimension_numbers<[1], [0], [0], [1], [0, 0, 1, 1], [], []>} : vector<64x32xf32>, vector<32x1xf32>, vector<64x1xf32> -> vector<64x1xf32>
    %c0_42 = arith.constant 0 : index
    %c0_43 = arith.constant 0 : index
    %63 = vector.load %arg5[%c0_42, %c0_43] : memref<64x1xf32, #tpu.memory_space<vmem>>, vector<64x1xf32>
    %64 = arith.addf %62, %63 : vector<64x1xf32>
    %c0_44 = arith.constant 0 : index
    %c0_45 = arith.constant 0 : index
    %c0_46 = arith.constant 0 : index
    %65 = vector.load %arg7[%c0_44, %c0_45, %c0_46] : memref<1x64x1xf32, #tpu.memory_space<vmem>>, vector<1x64x1xf32>
    %66 = vector.shape_cast %65 : vector<1x64x1xf32> to vector<64x1xf32>
    %67 = vector.shape_cast %64 : vector<64x1xf32> to vector<1x64x1xf32>
    tpu.vector_store %arg7[%c0_44, %c0_45, %c0_46], %67 {strides = array<i32>} : memref<1x64x1xf32, #tpu.memory_space<vmem>>, vector<1x64x1xf32>,
    return
  }
  func.func @transform_0(%arg0: i32) -> (i32, i32, i32) {
    %c0_i32 = arith.constant 0 : i32
    %c0_i32_0 = arith.constant 0 : i32
    %c0_i32_1 = arith.constant 0 : i32
    return %arg0, %c0_i32, %c0_i32_0 : i32, i32, i32
  }
  func.func @transform_1(%arg0: i32) -> (i32, i32, i32) {
    %c0_i32 = arith.constant 0 : i32
    %c0_i32_0 = arith.constant 0 : i32
    %c0_i32_1 = arith.constant 0 : i32
    %c0_i32_2 = arith.constant 0 : i32
    return %c0_i32, %c0_i32_0, %c0_i32_1 : i32, i32, i32
  }
  func.func @transform_2(%arg0: i32) -> (i32, i32) {
    %c0_i32 = arith.constant 0 : i32
    %c0_i32_0 = arith.constant 0 : i32
    %c0_i32_1 = arith.constant 0 : i32
    return %c0_i32, %c0_i32_0 : i32, i32
  }
  func.func @transform_3(%arg0: i32) -> (i32, i32) {
    %c0_i32 = arith.constant 0 : i32
    %c0_i32_0 = arith.constant 0 : i32
    %c0_i32_1 = arith.constant 0 : i32
    return %c0_i32, %c0_i32_0 : i32, i32
  }
  func.func @transform_4(%arg0: i32) -> (i32, i32) {
    %c0_i32 = arith.constant 0 : i32
    %c0_i32_0 = arith.constant 0 : i32
    %c0_i32_1 = arith.constant 0 : i32
    return %c0_i32, %c0_i32_0 : i32, i32
  }
  func.func @transform_5(%arg0: i32) -> (i32, i32) {
    %c0_i32 = arith.constant 0 : i32
    %c0_i32_0 = arith.constant 0 : i32
    %c0_i32_1 = arith.constant 0 : i32
    return %c0_i32, %c0_i32_0 : i32, i32
  }
  func.func @transform_6(%arg0: i32) -> (i32, i32, i32) {
    %c0_i32 = arith.constant 0 : i32
    %c0_i32_0 = arith.constant 0 : i32
    %c0_i32_1 = arith.constant 0 : i32
    return %arg0, %c0_i32, %c0_i32_0 : i32, i32, i32
  }
  func.func @transform_7(%arg0: i32) -> (i32, i32, i32) {
    %c0_i32 = arith.constant 0 : i32
    %c0_i32_0 = arith.constant 0 : i32
    %c0_i32_1 = arith.constant 0 : i32
    return %arg0, %c0_i32, %c0_i32_0 : i32, i32, i32
  }
}

</mosaic_0001>

<llo_original>
// kernel: i2p_forward.1
$region0: #{i2p_forward.1}
  #allocation0 [shape = 'u32[]', space=smem, size = 0x4, offset = 0x4, fixed_abs, tag = 'smem constant byte address 0x4 - core index']
  #allocation1 [shape = 'u32[144,128]{1,0:T(1,128)}', space=vmem, size = 0x12000, scoped, tag = 'internal scratch']
  %s0 = inlined_call_operand.vmem [shape: bf16[2,4,384], index: 0, kind: input, shape index: {}]
  %s1 = inlined_call_operand.vmem [shape: bf16[9,32,4], index: 1, kind: input, shape index: {}]
  %s2 = inlined_call_operand.vmem [shape: f32[32,1], index: 2, kind: input, shape index: {}]
  %s3 = inlined_call_operand.vmem [shape: f32[64,32], index: 3, kind: input, shape index: {}]
  %s4 = inlined_call_operand.vmem [shape: f32[64,1], index: 4, kind: input, shape index: {}]
  %s5 = inlined_call_operand.vmem [shape: f32[1,288], index: 5, kind: input, shape index: {}]
  %s6 = inlined_call_operand.vmem [shape: f32[2,64,1], index: 6, kind: output, shape index: {0}]
  %s7 = inlined_call_operand.vmem [shape: f32[2,32,1], index: 7, kind: output, shape index: {1}]
  %8 = xla_tuple %s6, %s7
  %s9 = sld [smem:[#allocation0]]
  $region65: #{i2p_forward.1} parent=0
    _
  %s11 = ssub.s32 1, %s9
  %s12 = scalar_select 0, %s11, %s9
  loop: start=0, step=1, limit=4
  $region2: #{i2p_forward.1} parent=0 // loop_pre_header
    _
  $region3: #{i2p_forward.1} parent=0 // loop_header
    %s14 = sphi 0, %s18
    %p15 = scmp.ge.s32.totalorder %s14, 4
    %s24 = sphi 0, %s26
    %s27 = sphi 0, %s24
    %s28 = sphi 0, %s27
    %s44 = sphi 0, %s28
    %s48 = sphi 0, %s48
    %s50 = sphi 0, %s48
    %s51 = sphi 0, %s50
    %s65 = sphi 0, %s51
    %s69 = sphi 0, %s69
    %s71 = sphi 0, %s69
    %s72 = sphi 0, %s71
    %s86 = sphi 0, %s72
    %s90 = sphi 0, %s90
    %s92 = sphi 0, %s90
    %s93 = sphi 0, %s92
    %s107 = sphi 0, %s93
    %s111 = sphi 0, %s111
    %s113 = sphi 0, %s111
    %s114 = sphi 0, %s113
    %s128 = sphi 0, %s114
    %s132 = sphi 0, %s132
    %s134 = sphi 0, %s132
    %s135 = sphi 0, %s134
    %s149 = sphi 0, %s135
    %s155 = sphi 0, %s157
    %s158 = sphi 0, %s155
    %s159 = sphi 0, %s158
    %s175 = sphi 0, %s159
    %s181 = sphi 0, %s183
    %s184 = sphi 0, %s181
    %s185 = sphi 0, %s184
    %s201 = sphi 0, %s185
  $region4: #{i2p_forward.1} parent=0 // loop_header_branch
    %17 = sbr.rel (%p15) target = $region8
  $region5: #{i2p_forward.1} parent=0 // loop_body
    %s19 = ssub.s32 %s14, 1
    %s20 = ssub.s32 %s14, 2
    %s21 = sadd.s32 %s14, 1
    %s22 = ssub.s32 %s14, %s21
    %p23 = scmp.eq.s32.totalorder %s22, 0
    %s25 = sadd.s32 %s24, 1
    %s26 = scalar_select %p23, %s24, %s25
    %p29 = pneg %p23
    %p30 = scmp.eq.s32.totalorder %s14, 1
    %p31 = por %p29, %p30
    %p32 = scmp.ne.s32.totalorder %s24, %s27
    %p33 = scmp.eq.s32.totalorder %s14, 0
    %p34 = por %p32, %p33
    %p35 = scmp.ne.s32.totalorder %s24, %s27
    %p36 = scmp.eq.s32.totalorder %s19, 1
    %p37 = por %p35, %p36
    %p38 = scmp.ne.s32.totalorder %s27, %s28
    %p39 = scmp.eq.s32.totalorder %s19, 0
    %p40 = por %p38, %p39
    %p41 = scmp.ne.s32.totalorder %s27, %s28
    %p42 = scmp.eq.s32.totalorder %s20, 1
    %p43 = por %p41, %p42
    %p45 = scmp.ne.s32.totalorder %s28, %s44
    %p46 = scmp.eq.s32.totalorder %s20, 0
    %p47 = por %p45, %p46
    %s49 = sadd.s32 %s48, 1
    %p52 = scmp.eq.s32.totalorder %s14, 1
    %p53 = scmp.ne.s32.totalorder %s48, %s50
    %p54 = scmp.eq.s32.totalorder %s14, 0
    %p55 = por %p53, %p54
    %p56 = scmp.ne.s32.totalorder %s48, %s50
    %p57 = scmp.eq.s32.totalorder %s19, 1
    %p58 = por %p56, %p57
    %p59 = scmp.ne.s32.totalorder %s50, %s51
    %p60 = scmp.eq.s32.totalorder %s19, 0
    %p61 = por %p59, %p60
    %p62 = scmp.ne.s32.totalorder %s50, %s51
    %p63 = scmp.eq.s32.totalorder %s20, 1
    %p64 = por %p62, %p63
    %p66 = scmp.ne.s32.totalorder %s51, %s65
    %p67 = scmp.eq.s32.totalorder %s20, 0
    %p68 = por %p66, %p67
    %s70 = sadd.s32 %s69, 1
    %p73 = scmp.eq.s32.totalorder %s14, 1
    %p74 = scmp.ne.s32.totalorder %s69, %s71
    %p75 = scmp.eq.s32.totalorder %s14, 0
    %p76 = por %p74, %p75
    %p77 = scmp.ne.s32.totalorder %s69, %s71
    %p78 = scmp.eq.s32.totalorder %s19, 1
    %p79 = por %p77, %p78
    %p80 = scmp.ne.s32.totalorder %s71, %s72
    %p81 = scmp.eq.s32.totalorder %s19, 0
    %p82 = por %p80, %p81
    %p83 = scmp.ne.s32.totalorder %s71, %s72
    %p84 = scmp.eq.s32.totalorder %s20, 1
    %p85 = por %p83, %p84
    %p87 = scmp.ne.s32.totalorder %s72, %s86
    %p88 = scmp.eq.s32.totalorder %s20, 0
    %p89 = por %p87, %p88
    %s91 = sadd.s32 %s90, 1
    %p94 = scmp.eq.s32.totalorder %s14, 1
    %p95 = scmp.ne.s32.totalorder %s90, %s92
    %p96 = scmp.eq.s32.totalorder %s14, 0
    %p97 = por %p95, %p96
    %p98 = scmp.ne.s32.totalorder %s90, %s92
    %p99 = scmp.eq.s32.totalorder %s19, 1
    %p100 = por %p98, %p99
    %p101 = scmp.ne.s32.totalorder %s92, %s93
    %p102 = scmp.eq.s32.totalorder %s19, 0
    %p103 = por %p101, %p102
    %p104 = scmp.ne.s32.totalorder %s92, %s93
    %p105 = scmp.eq.s32.totalorder %s20, 1
    %p106 = por %p104, %p105
    %p108 = scmp.ne.s32.totalorder %s93, %s107
    %p109 = scmp.eq.s32.totalorder %s20, 0
    %p110 = por %p108, %p109
    %s112 = sadd.s32 %s111, 1
    %p115 = scmp.eq.s32.totalorder %s14, 1
    %p116 = scmp.ne.s32.totalorder %s111, %s113
    %p117 = scmp.eq.s32.totalorder %s14, 0
    %p118 = por %p116, %p117
    %p119 = scmp.ne.s32.totalorder %s111, %s113
    %p120 = scmp.eq.s32.totalorder %s19, 1
    %p121 = por %p119, %p120
    %p122 = scmp.ne.s32.totalorder %s113, %s114
    %p123 = scmp.eq.s32.totalorder %s19, 0
    %p124 = por %p122, %p123
    %p125 = scmp.ne.s32.totalorder %s113, %s114
    %p126 = scmp.eq.s32.totalorder %s20, 1
    %p127 = por %p125, %p126
    %p129 = scmp.ne.s32.totalorder %s114, %s128
    %p130 = scmp.eq.s32.totalorder %s20, 0
    %p131 = por %p129, %p130
    %s133 = sadd.s32 %s132, 1
    %p136 = scmp.eq.s32.totalorder %s14, 1
    %p137 = scmp.ne.s32.totalorder %s132, %s134
    %p138 = scmp.eq.s32.totalorder %s14, 0
    %p139 = por %p137, %p138
    %p140 = scmp.ne.s32.totalorder %s132, %s134
    %p141 = scmp.eq.s32.totalorder %s19, 1
    %p142 = por %p140, %p141
    %p143 = scmp.ne.s32.totalorder %s134, %s135
    %p144 = scmp.eq.s32.totalorder %s19, 0
    %p145 = por %p143, %p144
    %p146 = scmp.ne.s32.totalorder %s134, %s135
    %p147 = scmp.eq.s32.totalorder %s20, 1
    %p148 = por %p146, %p147
    %p150 = scmp.ne.s32.totalorder %s135, %s149
    %p151 = scmp.eq.s32.totalorder %s20, 0
    %p152 = por %p150, %p151
    %s153 = ssub.s32 %s14, %s21
    %p154 = scmp.eq.s32.totalorder %s153, 0
    %s156 = sadd.s32 %s155, 1
    %s157 = scalar_select %p154, %s155, %s156
    %p160 = pneg %p154
    %p161 = scmp.eq.s32.totalorder %s14, 1
    %p162 = por %p160, %p161
    %p163 = scmp.ne.s32.totalorder %s155, %s158
    %p164 = scmp.eq.s32.totalorder %s14, 0
    %p165 = por %p163, %p164
    %p166 = scmp.ne.s32.totalorder %s155, %s158
    %p167 = scmp.eq.s32.totalorder %s19, 1
    %p168 = por %p166, %p167
    %p169 = scmp.ne.s32.totalorder %s158, %s159
    %p170 = scmp.eq.s32.totalorder %s19, 0
    %p171 = por %p169, %p170
    %p172 = scmp.ne.s32.totalorder %s158, %s159
    %p173 = scmp.eq.s32.totalorder %s20, 1
    %p174 = por %p172, %p173
    %p176 = scmp.ne.s32.totalorder %s159, %s175
    %p177 = scmp.eq.s32.totalorder %s20, 0
    %p178 = por %p176, %p177
    %s179 = ssub.s32 %s14, %s21
    %p180 = scmp.eq.s32.totalorder %s179, 0
    %s182 = sadd.s32 %s181, 1
    %s183 = scalar_select %p180, %s181, %s182
    %p186 = pneg %p180
    %p187 = scmp.eq.s32.totalorder %s14, 1
    %p188 = por %p186, %p187
    %p189 = scmp.ne.s32.totalorder %s181, %s184
    %p190 = scmp.eq.s32.totalorder %s14, 0
    %p191 = por %p189, %p190
    %p192 = scmp.ne.s32.totalorder %s181, %s184
    %p193 = scmp.eq.s32.totalorder %s19, 1
    %p194 = por %p192, %p193
    %p195 = scmp.ne.s32.totalorder %s184, %s185
    %p196 = scmp.eq.s32.totalorder %s19, 0
    %p197 = por %p195, %p196
    %p198 = scmp.ne.s32.totalorder %s184, %s185
    %p199 = scmp.eq.s32.totalorder %s20, 1
    %p200 = por %p198, %p199
    %p202 = scmp.ne.s32.totalorder %s185, %s201
    %p203 = scmp.eq.s32.totalorder %s20, 0
    %p204 = por %p202, %p203
    %p205 = scmp.le.s32.totalorder 1, %s14
    %p206 = scmp.lt.s32.totalorder %s14, 3
    %p207 = pnand %p205, %p206
    %p208 = pneg %p207
    // Predicated region
    $region9: #{i2p_forward.1} parent=5 // pred_check
      _
    $region10: #{i2p_forward.1} parent=5 // pred_check_branch
      %210 = sbr.rel (%p207) target = $region12
    $region11: #{i2p_forward.1} parent=5 // pred_region
      %s211 = ssub.s32 %s14, 1
      // Predicated region
      $region13: #{i2p_forward.1} parent=11 // pred_check
        %p212 = pneg %p61
      $region14: #{i2p_forward.1} parent=11 // pred_check_branch
        %214 = sbr.rel (%p212) target = $region16
      $region15: #{i2p_forward.1} parent=11 // pred_region
        _
      $region16: #{i2p_forward.1} parent=11 // pred_fallthru
        _
      // Predicated region
      $region17: #{i2p_forward.1} parent=11 // pred_check
        %p215 = pneg %p82
      $region18: #{i2p_forward.1} parent=11 // pred_check_branch
        %217 = sbr.rel (%p215) target = $region20
      $region19: #{i2p_forward.1} parent=11 // pred_region
        _
      $region20: #{i2p_forward.1} parent=11 // pred_fallthru
        _
      // Predicated region
      $region21: #{i2p_forward.1} parent=11 // pred_check
        %p218 = pneg %p103
      $region22: #{i2p_forward.1} parent=11 // pred_check_branch
        %220 = sbr.rel (%p218) target = $region24
      $region23: #{i2p_forward.1} parent=11 // pred_region
        _
      $region24: #{i2p_forward.1} parent=11 // pred_fallthru
        _
      // Predicated region
      $region25: #{i2p_forward.1} parent=11 // pred_check
        %p221 = pneg %p124
      $region26: #{i2p_forward.1} parent=11 // pred_check_branch
        %223 = sbr.rel (%p221) target = $region28
      $region27: #{i2p_forward.1} parent=11 // pred_region
        _
      $region28: #{i2p_forward.1} parent=11 // pred_fallthru
        _
      // Predicated region
      $region29: #{i2p_forward.1} parent=11 // pred_check
        %p224 = pneg %p145
      $region30: #{i2p_forward.1} parent=11 // pred_check_branch
        %226 = sbr.rel (%p224) target = $region32
      $region31: #{i2p_forward.1} parent=11 // pred_region
        _
      $region32: #{i2p_forward.1} parent=11 // pred_fallthru
        _
    $region12: #{i2p_forward.1} parent=5 // pred_fallthru
      _
    %p227 = scmp.lt.s32.totalorder %s14, 2
    // Predicated region
    $region33: #{i2p_forward.1} parent=5 // pred_check
      %p228 = pneg %p227
    $region34: #{i2p_forward.1} parent=5 // pred_check_branch
      %230 = sbr.rel (%p228) target = $region36
    $region35: #{i2p_forward.1} parent=5 // pred_region
      // Predicated region
      $region37: #{i2p_forward.1} parent=35 // pred_check
        %p231 = pneg %p34
      $region38: #{i2p_forward.1} parent=35 // pred_check_branch
        %233 = sbr.rel (%p231) target = $region40
      $region39: #{i2p_forward.1} parent=35 // pred_region
        %p234 = scmp.lt.s32.totalorder %s14, 1
        %s235 = scalar_select %p234, %s14, 1
        %s236 = smul.addr %s235, 3
        %s237 = smul.addr %s236, 2
        %s238 = scalar_lea.vmem %s0, %s237
      $region40: #{i2p_forward.1} parent=35 // pred_fallthru
        _
    $region36: #{i2p_forward.1} parent=5 // pred_fallthru
      _
    %p239 = scmp.le.s32.totalorder 1, %s14
    %p240 = scmp.lt.s32.totalorder %s14, 3
    %p241 = pnand %p239, %p240
    %p242 = pneg %p241
    // Predicated region
    $region41: #{i2p_forward.1} parent=5 // pred_check
      _
    $region42: #{i2p_forward.1} parent=5 // pred_check_branch
      %244 = sbr.rel (%p241) target = $region44
    $region43: #{i2p_forward.1} parent=5 // pred_region
      %s245 = ssub.s32 %s14, 1
      %p246 = scmp.lt.s32.totalorder %s19, 1
      %s247 = scalar_select %p246, %s19, 1
      %s248 = smul.addr %s247, 3
      %s249 = smul.addr %s248, 2
      %s250 = scalar_lea.vmem %s0, %s249
      %p251 = pneg %p40
      %p252 = pneg %p37
      %p253 = pneg %p61
      %p254 = pneg %p58
      %p255 = pneg %p82
      %p256 = pneg %p79
      %p257 = pneg %p103
      %p258 = pneg %p100
      %p259 = pneg %p124
      %p260 = pneg %p121
      %p261 = pneg %p145
      %p262 = pneg %p142
      %p263 = pneg %p171
      %p264 = pneg %p168
      %p265 = scmp.lt.s32.totalorder %s19, 1
      %s266 = scalar_select %p265, %s19, 1
      %s267 = smul.addr %s266, 8
      %s268 = smul.addr %s267, 8
      %s269 = scalar_lea.vmem %s6, %s268
      %p270 = pneg %p197
      %p271 = pneg %p194
      %p272 = scmp.lt.s32.totalorder %s19, 1
      %s273 = scalar_select %p272, %s19, 1
      %s274 = smul.addr %s273, 4
      %s275 = smul.addr %s274, 8
      %s276 = scalar_lea.vmem %s7, %s275
      %p277 = scmp.lt.s32.totalorder %s19, 1
      %s278 = scalar_select %p277, %s19, 1
      %s279 = smul.addr %s278, 3
      %s280 = smul.addr %s279, 2
      %s281 = scalar_lea.vmem %s0, %s280
      %p282 = scmp.lt.s32.totalorder %s19, 1
      %s283 = scalar_select %p282, %s19, 1
      %s284 = smul.addr %s283, 8
      %s285 = smul.addr %s284, 8
      %s286 = scalar_lea.vmem %s6, %s285
      %p287 = scmp.lt.s32.totalorder %s19, 1
      %s288 = scalar_select %p287, %s19, 1
      %s289 = smul.addr %s288, 4
      %s290 = smul.addr %s289, 8
      %s291 = scalar_lea.vmem %s7, %s290
      %v293 = vld [vmem:[%s281] sm:$0x3f]
      %v294 = vld [vmem:[%s1] sm:$0xf]
      %v295 = vld [vmem:[%s1 + $0x4] sm:$0xf]
      %v296 = vld [vmem:[%s1 + $0x8] sm:$0xf]
      %v297 = vld [vmem:[%s1 + $0xc] sm:$0xf]
      %s298 = scalar_lea.vmem %s1, 16
      %v299 = vld [vmem:[%s298] sm:$0xf]
      %v300 = vld [vmem:[%s298 + $0x4] sm:$0xf]
      %v301 = vld [vmem:[%s298 + $0x8] sm:$0xf]
      %v302 = vld [vmem:[%s298 + $0xc] sm:$0xf]
      %v307 = vunpack.c.l.b16 %v299
      %v308 = vunpack.c.l.b16 %v300
      %v309 = vunpack.c.l.b16 %v301
      %v310 = vunpack.c.l.b16 %v302
      %v311 = vpack.c.b16 %v308, %v307
      %v312 = vpack.c.b16 %v310, %v309
      %v314 = vcombine.high %v293, %v293
      %v316 = vunpack.c.l.s4 1983009808
      %v317 = vunpack.c.0.s8 %v316
      %v318 = vlaneseq
      %v319 = vshrl.u32 %v318, 7
      %v320 = vsub.s32 %v317, %v319
      %v321 = vrot.slane %v293, %v320
      %v323 = vunpack.c.l.s4 1983009808
      %v324 = vunpack.c.0.s8 %v323
      %v325 = vlaneseq
      %v326 = vshrl.u32 %v325, 7
      %v327 = vsub.s32 %v324, %v326
      %v328 = vrot.slane %v314, %v327
      %v329 = vcombine.high %v321, %v321
      %330 = vrot.lane.b32.xlu0 %v321, 127
      %v331 = vpop.permute.xlu0 %330
      %332 = vrot.lane.b32.xlu0 %v329, 127
      %v333 = vpop.permute.xlu0 %332
      %334 = vrot.lane.b32.xlu0 %v328, 127
      %v335 = vpop.permute.xlu0 %334
      %vm336 = vcmask 1039360
      %v337 = vsel %vm336, %v331, %v333
      %v338 = vsel %vm336, %v333, %v335
      %vm339 = vcmask 31744
      %v341 = vsel %vm339, %v311, 0
      %v344 = vsel %vm339, %v312, 0
      %vm346 = vcmask 1041408
      %v348 = vsel %vm346, %v337, 0
      %v351 = vsel %vm346, %v338, 0
      %v354 = vsel %vm346, %v335, 0
      %356 = vmatprep.subr.bf16.mxu0 %v351
      %357 = vmatpush1.bf16.msra.mxu0 %v348
      %358 = vmatprep.subr.bf16.mxu0 0
      %359 = vmatpush1.bf16.msra.mxu0 0
      %360 = vmatprep.subr.bf16.mxu0 0
      %361 = vmatpush1.bf16.msra.mxu0 0
      %362 = vmatprep.subr.bf16.mxu0 0
      %363 = vmatpush1.bf16.msra.mxu0 0
      %364 = vmatprep.subr.bf16.mxu0 0
      %365 = vmatpush1.bf16.msra.mxu0 0
      %366 = vmatprep.subr.bf16.mxu0 0
      %367 = vmatpush1.bf16.msra.mxu0 0
      %368 = vmatprep.subr.bf16.mxu0 0
      %369 = vmatpush1.bf16.msra.mxu0 0
      %370 = vmatprep.subr.bf16.mxu0 0
      %371 = vmatpush1.bf16.msra.mxu0 0
      %372 = vmatprep.subr.bf16.mxu0 0
      %373 = vmatpush1.bf16.msra.mxu0 0
      %374 = vmatprep.subr.bf16.mxu0 0
      %375 = vmatpush1.bf16.msra.mxu0 0
      %376 = vmatprep.subr.bf16.mxu0 0
      %377 = vmatpush1.bf16.msra.mxu0 0
      %378 = vmatprep.subr.bf16.mxu0 0
      %379 = vmatpush1.bf16.msra.mxu0 0
      %380 = vmatprep.subr.bf16.mxu0 0
      %381 = vmatpush1.bf16.msra.mxu0 0
      %382 = vmatprep.subr.bf16.mxu0 0
      %383 = vmatpush1.bf16.msra.mxu0 0
      %384 = vmatprep.subr.bf16.mxu0 0
      %385 = vmatpush1.bf16.msra.mxu0 0
      %386 = vmatprep.subr.bf16.mxu0 0
      %387 = vmatpush1.bf16.msra.mxu0 0
      %388 = vmatprep.mubr.bf16.mxu0 0
      %389 = vmatmul.mubr.bf16.gmra.mrb[0].mxu0 %v341
      %v390 = vpop.f32.mrb[0].mxu0
      %v391 = vadd.f32 0.0, %v390
      %v392 = vpop.f32.mrb[0].mxu0
      %v393 = vadd.f32 0.0, %v392
      %v394 = vpop.f32.mrb[0].mxu0
      %v395 = vadd.f32 0.0, %v394
      %v396 = vpop.f32.mrb[0].mxu0
      %v397 = vadd.f32 0.0, %v396
      %398 = vmatprep.mubr.bf16.mxu0 0
      %399 = vmatmul.mubr.bf16.gmra.mrb[0].mxu0 %v344
      %v400 = vpop.f32.mrb[0].mxu0
      %v401 = vadd.f32 0.0, %v400
      %v402 = vpop.f32.mrb[0].mxu0
      %v403 = vadd.f32 0.0, %v402
      %v404 = vpop.f32.mrb[0].mxu0
      %v405 = vadd.f32 0.0, %v404
      %v406 = vpop.f32.mrb[0].mxu0
      %v407 = vadd.f32 0.0, %v406
      %408 = vdwg.mxu0
      %409 = vmatprep.subr.bf16.mxu0 0
      %410 = vmatpush1.bf16.msra.mxu0 %v354
      %411 = vmatprep.subr.bf16.mxu0 0
      %412 = vmatpush1.bf16.msra.mxu0 0
      %413 = vmatprep.subr.bf16.mxu0 0
      %414 = vmatpush1.bf16.msra.mxu0 0
      %415 = vmatprep.subr.bf16.mxu0 0
      %416 = vmatpush1.bf16.msra.mxu0 0
      %417 = vmatprep.subr.bf16.mxu0 0
      %418 = vmatpush1.bf16.msra.mxu0 0
      %419 = vmatprep.subr.bf16.mxu0 0
      %420 = vmatpush1.bf16.msra.mxu0 0
      %421 = vmatprep.subr.bf16.mxu0 0
      %422 = vmatpush1.bf16.msra.mxu0 0
      %423 = vmatprep.subr.bf16.mxu0 0
      %424 = vmatpush1.bf16.msra.mxu0 0
      %425 = vmatprep.subr.bf16.mxu0 0
      %426 = vmatpush1.bf16.msra.mxu0 0
      %427 = vmatprep.subr.bf16.mxu0 0
      %428 = vmatpush1.bf16.msra.mxu0 0
      %429 = vmatprep.subr.bf16.mxu0 0
      %430 = vmatpush1.bf16.msra.mxu0 0
      %431 = vmatprep.subr.bf16.mxu0 0
      %432 = vmatpush1.bf16.msra.mxu0 0
      %433 = vmatprep.subr.bf16.mxu0 0
      %434 = vmatpush1.bf16.msra.mxu0 0
      %435 = vmatprep.subr.bf16.mxu0 0
      %436 = vmatpush1.bf16.msra.mxu0 0
      %437 = vmatprep.subr.bf16.mxu0 0
      %438 = vmatpush1.bf16.msra.mxu0 0
      %439 = vmatprep.subr.bf16.mxu0 0
      %440 = vmatpush1.bf16.msra.mxu0 0
      %441 = vmatprep.mubr.bf16.mxu0 0
      %442 = vmatmul.mubr.bf16.gmra.mrb[0].mxu0 %v341
      %v443 = vpop.f32.mrb[0].mxu0
      %v444 = vadd.f32 0.0, %v443
      %v445 = vpop.f32.mrb[0].mxu0
      %v446 = vpop.f32.mrb[0].mxu0
      %v447 = vadd.f32 0.0, %v446
      %v448 = vpop.f32.mrb[0].mxu0
      %449 = vmatprep.mubr.bf16.mxu0 0
      %450 = vmatmul.mubr.bf16.gmra.mrb[0].mxu0 %v344
      %v451 = vpop.f32.mrb[0].mxu0
      %v452 = vadd.f32 0.0, %v451
      %v453 = vpop.f32.mrb[0].mxu0
      %v454 = vpop.f32.mrb[0].mxu0
      %v455 = vadd.f32 0.0, %v454
      %v456 = vpop.f32.mrb[0].mxu0
      %457 = vdwg.mxu0
      %v462 = vunpack.c.l.b16 %v294
      %v463 = vunpack.c.l.b16 %v295
      %v464 = vunpack.c.l.b16 %v296
      %v465 = vunpack.c.l.b16 %v297
      %v466 = vpack.c.b16 %v463, %v462
      %v467 = vpack.c.b16 %v465, %v464
      %v469 = vsel %vm339, %v466, 0
      %v472 = vsel %vm339, %v467, 0
      %v475 = vsel %vm346, %v321, 0
      %v478 = vsel %vm346, %v329, 0
      %v481 = vsel %vm346, %v328, 0
      %483 = vmatprep.subr.bf16.mxu0 %v478
      %484 = vmatpush1.bf16.msra.mxu0 %v475
      %485 = vmatprep.subr.bf16.mxu0 0
      %486 = vmatpush1.bf16.msra.mxu0 0
      %487 = vmatprep.subr.bf16.mxu0 0
      %488 = vmatpush1.bf16.msra.mxu0 0
      %489 = vmatprep.subr.bf16.mxu0 0
      %490 = vmatpush1.bf16.msra.mxu0 0
      %491 = vmatprep.subr.bf16.mxu0 0
      %492 = vmatpush1.bf16.msra.mxu0 0
      %493 = vmatprep.subr.bf16.mxu0 0
      %494 = vmatpush1.bf16.msra.mxu0 0
      %495 = vmatprep.subr.bf16.mxu0 0
      %496 = vmatpush1.bf16.msra.mxu0 0
      %497 = vmatprep.subr.bf16.mxu0 0
      %498 = vmatpush1.bf16.msra.mxu0 0
      %499 = vmatprep.subr.bf16.mxu0 0
      %500 = vmatpush1.bf16.msra.mxu0 0
      %501 = vmatprep.subr.bf16.mxu0 0
      %502 = vmatpush1.bf16.msra.mxu0 0
      %503 = vmatprep.subr.bf16.mxu0 0
      %504 = vmatpush1.bf16.msra.mxu0 0
      %505 = vmatprep.subr.bf16.mxu0 0
      %506 = vmatpush1.bf16.msra.mxu0 0
      %507 = vmatprep.subr.bf16.mxu0 0
      %508 = vmatpush1.bf16.msra.mxu0 0
      %509 = vmatprep.subr.bf16.mxu0 0
      %510 = vmatpush1.bf16.msra.mxu0 0
      %511 = vmatprep.subr.bf16.mxu0 0
      %512 = vmatpush1.bf16.msra.mxu0 0
      %513 = vmatprep.subr.bf16.mxu0 0
      %514 = vmatpush1.bf16.msra.mxu0 0
      %515 = vmatprep.mubr.bf16.mxu0 0
      %516 = vmatmul.mubr.bf16.gmra.mrb[0].mxu0 %v469
      %v517 = vpop.f32.mrb[0].mxu0
      %v518 = vadd.f32 %v391, %v517
      %v519 = vpop.f32.mrb[0].mxu0
      %v520 = vadd.f32 %v393, %v519
      %v521 = vpop.f32.mrb[0].mxu0
      %v522 = vadd.f32 %v395, %v521
      %v523 = vpop.f32.mrb[0].mxu0
      %v524 = vadd.f32 %v397, %v523
      %525 = vmatprep.mubr.bf16.mxu0 0
      %526 = vmatmul.mubr.bf16.gmra.mrb[0].mxu0 %v472
      %v527 = vpop.f32.mrb[0].mxu0
      %v528 = vadd.f32 %v401, %v527
      %v529 = vpop.f32.mrb[0].mxu0
      %v530 = vadd.f32 %v403, %v529
      %v531 = vpop.f32.mrb[0].mxu0
      %v532 = vadd.f32 %v405, %v531
      %v533 = vpop.f32.mrb[0].mxu0
      %v534 = vadd.f32 %v407, %v533
      %535 = vdwg.mxu0
      %536 = vmatprep.subr.bf16.mxu0 0
      %537 = vmatpush1.bf16.msra.mxu0 %v481
      %538 = vmatprep.subr.bf16.mxu0 0
      %539 = vmatpush1.bf16.msra.mxu0 0
      %540 = vmatprep.subr.bf16.mxu0 0
      %541 = vmatpush1.bf16.msra.mxu0 0
      %542 = vmatprep.subr.bf16.mxu0 0
      %543 = vmatpush1.bf16.msra.mxu0 0
      %544 = vmatprep.subr.bf16.mxu0 0
      %545 = vmatpush1.bf16.msra.mxu0 0
      %546 = vmatprep.subr.bf16.mxu0 0
      %547 = vmatpush1.bf16.msra.mxu0 0
      %548 = vmatprep.subr.bf16.mxu0 0
      %549 = vmatpush1.bf16.msra.mxu0 0
      %550 = vmatprep.subr.bf16.mxu0 0
      %551 = vmatpush1.bf16.msra.mxu0 0
      %552 = vmatprep.subr.bf16.mxu0 0
      %553 = vmatpush1.bf16.msra.mxu0 0
      %554 = vmatprep.subr.bf16.mxu0 0
      %555 = vmatpush1.bf16.msra.mxu0 0
      %556 = vmatprep.subr.bf16.mxu0 0
      %557 = vmatpush1.bf16.msra.mxu0 0
      %558 = vmatprep.subr.bf16.mxu0 0
      %559 = vmatpush1.bf16.msra.mxu0 0
      %560 = vmatprep.subr.bf16.mxu0 0
      %561 = vmatpush1.bf16.msra.mxu0 0
      %562 = vmatprep.subr.bf16.mxu0 0
      %563 = vmatpush1.bf16.msra.mxu0 0
      %564 = vmatprep.subr.bf16.mxu0 0
      %565 = vmatpush1.bf16.msra.mxu0 0
      %566 = vmatprep.subr.bf16.mxu0 0
      %567 = vmatpush1.bf16.msra.mxu0 0
      %568 = vmatprep.mubr.bf16.mxu0 0
      %569 = vmatmul.mubr.bf16.gmra.mrb[0].mxu0 %v469
      %v570 = vpop.f32.mrb[0].mxu0
      %v571 = vadd.f32 %v444, %v570
      %v572 = vpop.f32.mrb[0].mxu0
      %v573 = vpop.f32.mrb[0].mxu0
      %v574 = vadd.f32 %v447, %v573
      %v575 = vpop.f32.mrb[0].mxu0
      %576 = vmatprep.mubr.bf16.mxu0 0
      %577 = vmatmul.mubr.bf16.gmra.mrb[0].mxu0 %v472
      %v578 = vpop.f32.mrb[0].mxu0
      %v579 = vadd.f32 %v452, %v578
      %v580 = vpop.f32.mrb[0].mxu0
      %v581 = vpop.f32.mrb[0].mxu0
      %v582 = vadd.f32 %v455, %v581
      %v583 = vpop.f32.mrb[0].mxu0
      %584 = vdwg.mxu0
      %s585 = scalar_lea.vmem %s1, 32
      %v586 = vld [vmem:[%s585] sm:$0xf]
      %v587 = vld [vmem:[%s585 + $0x4] sm:$0xf]
      %v588 = vld [vmem:[%s585 + $0x8] sm:$0xf]
      %v589 = vld [vmem:[%s585 + $0xc] sm:$0xf]
      %v594 = vunpack.c.l.b16 %v586
      %v595 = vunpack.c.l.b16 %v587
      %v596 = vunpack.c.l.b16 %v588
      %v597 = vunpack.c.l.b16 %v589
      %v598 = vpack.c.b16 %v595, %v594
      %v599 = vpack.c.b16 %v597, %v596
      %600 = vrot.lane.b32.xlu0 %v321, 126
      %v601 = vpop.permute.xlu0 %600
      %602 = vrot.lane.b32.xlu0 %v329, 126
      %v603 = vpop.permute.xlu0 %602
      %604 = vrot.lane.b32.xlu0 %v328, 126
      %v605 = vpop.permute.xlu0 %604
      %vm606 = vcmask 1031168
      %v607 = vsel %vm606, %v601, %v603
      %v608 = vsel %vm606, %v603, %v605
      %v610 = vsel %vm339, %v598, 0
      %v613 = vsel %vm339, %v599, 0
      %v616 = vsel %vm346, %v607, 0
      %v619 = vsel %vm346, %v608, 0
      %v622 = vsel %vm346, %v605, 0
      %624 = vmatprep.subr.bf16.mxu0 %v619
      %625 = vmatpush1.bf16.msra.mxu0 %v616
      %626 = vmatprep.subr.bf16.mxu0 0
      %627 = vmatpush1.bf16.msra.mxu0 0
      %628 = vmatprep.subr.bf16.mxu0 0
      %629 = vmatpush1.bf16.msra.mxu0 0
      %630 = vmatprep.subr.bf16.mxu0 0
      %631 = vmatpush1.bf16.msra.mxu0 0
      %632 = vmatprep.subr.bf16.mxu0 0
      %633 = vmatpush1.bf16.msra.mxu0 0
      %634 = vmatprep.subr.bf16.mxu0 0
      %635 = vmatpush1.bf16.msra.mxu0 0
      %636 = vmatprep.subr.bf16.mxu0 0
      %637 = vmatpush1.bf16.msra.mxu0 0
      %638 = vmatprep.subr.bf16.mxu0 0
      %639 = vmatpush1.bf16.msra.mxu0 0
      %640 = vmatprep.subr.bf16.mxu0 0
      %641 = vmatpush1.bf16.msra.mxu0 0
      %642 = vmatprep.subr.bf16.mxu0 0
      %643 = vmatpush1.bf16.msra.mxu0 0
      %644 = vmatprep.subr.bf16.mxu0 0
      %645 = vmatpush1.bf16.msra.mxu0 0
      %646 = vmatprep.subr.bf16.mxu0 0
      %647 = vmatpush1.bf16.msra.mxu0 0
      %648 = vmatprep.subr.bf16.mxu0 0
      %649 = vmatpush1.bf16.msra.mxu0 0
      %650 = vmatprep.subr.bf16.mxu0 0
      %651 = vmatpush1.bf16.msra.mxu0 0
      %652 = vmatprep.subr.bf16.mxu0 0
      %653 = vmatpush1.bf16.msra.mxu0 0
      %654 = vmatprep.subr.bf16.mxu0 0
      %655 = vmatpush1.bf16.msra.mxu0 0
      %656 = vmatprep.mubr.bf16.mxu0 0
      %657 = vmatmul.mubr.bf16.gmra.mrb[0].mxu0 %v610
      %v658 = vpop.f32.mrb[0].mxu0
      %v659 = vadd.f32 0.0, %v658
      %v660 = vpop.f32.mrb[0].mxu0
      %v661 = vadd.f32 0.0, %v660
      %v662 = vpop.f32.mrb[0].mxu0
      %v663 = vadd.f32 0.0, %v662
      %v664 = vpop.f32.mrb[0].mxu0
      %v665 = vadd.f32 0.0, %v664
      %666 = vmatprep.mubr.bf16.mxu0 0
      %667 = vmatmul.mubr.bf16.gmra.mrb[0].mxu0 %v613
      %v668 = vpop.f32.mrb[0].mxu0
      %v669 = vadd.f32 0.0, %v668
      %v670 = vpop.f32.mrb[0].mxu0
      %v671 = vadd.f32 0.0, %v670
      %v672 = vpop.f32.mrb[0].mxu0
      %v673 = vadd.f32 0.0, %v672
      %v674 = vpop.f32.mrb[0].mxu0
      %v675 = vadd.f32 0.0, %v674
      %676 = vdwg.mxu0
      %677 = vmatprep.subr.bf16.mxu0 0
      %678 = vmatpush1.bf16.msra.mxu0 %v622
      %679 = vmatprep.subr.bf16.mxu0 0
      %680 = vmatpush1.bf16.msra.mxu0 0
      %681 = vmatprep.subr.bf16.mxu0 0
      %682 = vmatpush1.bf16.msra.mxu0 0
      %683 = vmatprep.subr.bf16.mxu0 0
      %684 = vmatpush1.bf16.msra.mxu0 0
      %685 = vmatprep.subr.bf16.mxu0 0
      %686 = vmatpush1.bf16.msra.mxu0 0
      %687 = vmatprep.subr.bf16.mxu0 0
      %688 = vmatpush1.bf16.msra.mxu0 0
      %689 = vmatprep.subr.bf16.mxu0 0
      %690 = vmatpush1.bf16.msra.mxu0 0
      %691 = vmatprep.subr.bf16.mxu0 0
      %692 = vmatpush1.bf16.msra.mxu0 0
      %693 = vmatprep.subr.bf16.mxu0 0
      %694 = vmatpush1.bf16.msra.mxu0 0
      %695 = vmatprep.subr.bf16.mxu0 0
      %696 = vmatpush1.bf16.msra.mxu0 0
      %697 = vmatprep.subr.bf16.mxu0 0
      %698 = vmatpush1.bf16.msra.mxu0 0
      %699 = vmatprep.subr.bf16.mxu0 0
      %700 = vmatpush1.bf16.msra.mxu0 0
      %701 = vmatprep.subr.bf16.mxu0 0
      %702 = vmatpush1.bf16.msra.mxu0 0
      %703 = vmatprep.subr.bf16.mxu0 0
      %704 = vmatpush1.bf16.msra.mxu0 0
      %705 = vmatprep.subr.bf16.mxu0 0
      %706 = vmatpush1.bf16.msra.mxu0 0
      %707 = vmatprep.subr.bf16.mxu0 0
      %708 = vmatpush1.bf16.msra.mxu0 0
      %709 = vmatprep.mubr.bf16.mxu0 0
      %710 = vmatmul.mubr.bf16.gmra.mrb[0].mxu0 %v610
      %v711 = vpop.f32.mrb[0].mxu0
      %v712 = vadd.f32 0.0, %v711
      %v713 = vpop.f32.mrb[0].mxu0
      %v714 = vpop.f32.mrb[0].mxu0
      %v715 = vadd.f32 0.0, %v714
      %v716 = vpop.f32.mrb[0].mxu0
      %717 = vmatprep.mubr.bf16.mxu0 0
      %718 = vmatmul.mubr.bf16.gmra.mrb[0].mxu0 %v613
      %v719 = vpop.f32.mrb[0].mxu0
      %v720 = vadd.f32 0.0, %v719
      %v721 = vpop.f32.mrb[0].mxu0
      %v722 = vpop.f32.mrb[0].mxu0
      %v723 = vadd.f32 0.0, %v722
      %v724 = vpop.f32.mrb[0].mxu0
      %725 = vdwg.mxu0
      %v726 = vadd.f32 %v518, %v659
      %v727 = vadd.f32 %v520, %v661
      %v728 = vadd.f32 %v571, %v712
      %v729 = vadd.f32 %v522, %v663
      %v730 = vadd.f32 %v524, %v665
      %v731 = vadd.f32 %v574, %v715
      %v732 = vadd.f32 %v528, %v669
      %v733 = vadd.f32 %v530, %v671
      %v734 = vadd.f32 %v579, %v720
      %v735 = vadd.f32 %v532, %v673
      %v736 = vadd.f32 %v534, %v675
      %v737 = vadd.f32 %v582, %v723
      %s738 = scalar_lea.vmem %s1, 48
      %v739 = vld [vmem:[%s738] sm:$0xf]
      %v740 = vld [vmem:[%s738 + $0x4] sm:$0xf]
      %v741 = vld [vmem:[%s738 + $0x8] sm:$0xf]
      %v742 = vld [vmem:[%s738 + $0xc] sm:$0xf]
      %v747 = vunpack.c.l.b16 %v739
      %v748 = vunpack.c.l.b16 %v740
      %v749 = vunpack.c.l.b16 %v741
      %v750 = vunpack.c.l.b16 %v742
      %v751 = vpack.c.b16 %v748, %v747
      %v752 = vpack.c.b16 %v750, %v749
      %753 = vrot.lane.b32.xlu0 %v321, 110
      %v754 = vpop.permute.xlu0 %753
      %755 = vrot.lane.b32.xlu0 %v329, 110
      %v756 = vpop.permute.xlu0 %755
      %757 = vrot.lane.b32.xlu0 %v328, 110
      %v758 = vpop.permute.xlu0 %757
      %vm759 = vcmask 900096
      %v760 = vsel %vm759, %v754, %v756
      %v761 = vsel %vm759, %v756, %v758
      %v763 = vsel %vm339, %v751, 0
      %v766 = vsel %vm339, %v752, 0
      %v769 = vsel %vm346, %v760, 0
      %v772 = vsel %vm346, %v761, 0
      %v775 = vsel %vm346, %v758, 0
      %777 = vmatprep.subr.bf16.mxu0 %v772
      %778 = vmatpush1.bf16.msra.mxu0 %v769
      %779 = vmatprep.subr.bf16.mxu0 0
      %780 = vmatpush1.bf16.msra.mxu0 0
      %781 = vmatprep.subr.bf16.mxu0 0
      %782 = vmatpush1.bf16.msra.mxu0 0
      %783 = vmatprep.subr.bf16.mxu0 0
      %784 = vmatpush1.bf16.msra.mxu0 0
      %785 = vmatprep.subr.bf16.mxu0 0
      %786 = vmatpush1.bf16.msra.mxu0 0
      %787 = vmatprep.subr.bf16.mxu0 0
      %788 = vmatpush1.bf16.msra.mxu0 0
      %789 = vmatprep.subr.bf16.mxu0 0
      %790 = vmatpush1.bf16.msra.mxu0 0
      %791 = vmatprep.subr.bf16.mxu0 0
      %792 = vmatpush1.bf16.msra.mxu0 0
      %793 = vmatprep.subr.bf16.mxu0 0
      %794 = vmatpush1.bf16.msra.mxu0 0
      %795 = vmatprep.subr.bf16.mxu0 0
      %796 = vmatpush1.bf16.msra.mxu0 0
      %797 = vmatprep.subr.bf16.mxu0 0
      %798 = vmatpush1.bf16.msra.mxu0 0
      %799 = vmatprep.subr.bf16.mxu0 0
      %800 = vmatpush1.bf16.msra.mxu0 0
      %801 = vmatprep.subr.bf16.mxu0 0
      %802 = vmatpush1.bf16.msra.mxu0 0
      %803 = vmatprep.subr.bf16.mxu0 0
      %804 = vmatpush1.bf16.msra.mxu0 0
      %805 = vmatprep.subr.bf16.mxu0 0
      %806 = vmatpush1.bf16.msra.mxu0 0
      %807 = vmatprep.subr.bf16.mxu0 0
      %808 = vmatpush1.bf16.msra.mxu0 0
      %809 = vmatprep.mubr.bf16.mxu0 0
      %810 = vmatmul.mubr.bf16.gmra.mrb[0].mxu0 %v763
      %v811 = vpop.f32.mrb[0].mxu0
      %v812 = vadd.f32 0.0, %v811
      %v813 = vpop.f32.mrb[0].mxu0
      %v814 = vadd.f32 0.0, %v813
      %v815 = vpop.f32.mrb[0].mxu0
      %v816 = vadd.f32 0.0, %v815
      %v817 = vpop.f32.mrb[0].mxu0
      %v818 = vadd.f32 0.0, %v817
      %819 = vmatprep.mubr.bf16.mxu0 0
      %820 = vmatmul.mubr.bf16.gmra.mrb[0].mxu0 %v766
      %v821 = vpop.f32.mrb[0].mxu0
      %v822 = vadd.f32 0.0, %v821
      %v823 = vpop.f32.mrb[0].mxu0
      %v824 = vadd.f32 0.0, %v823
      %v825 = vpop.f32.mrb[0].mxu0
      %v826 = vadd.f32 0.0, %v825
      %v827 = vpop.f32.mrb[0].mxu0
      %v828 = vadd.f32 0.0, %v827
      %829 = vdwg.mxu0
      %830 = vmatprep.subr.bf16.mxu0 0
      %831 = vmatpush1.bf16.msra.mxu0 %v775
      %832 = vmatprep.subr.bf16.mxu0 0
      %833 = vmatpush1.bf16.msra.mxu0 0
      %834 = vmatprep.subr.bf16.mxu0 0
      %835 = vmatpush1.bf16.msra.mxu0 0
      %836 = vmatprep.subr.bf16.mxu0 0
      %837 = vmatpush1.bf16.msra.mxu0 0
      %838 = vmatprep.subr.bf16.mxu0 0
      %839 = vmatpush1.bf16.msra.mxu0 0
      %840 = vmatprep.subr.bf16.mxu0 0
      %841 = vmatpush1.bf16.msra.mxu0 0
      %842 = vmatprep.subr.bf16.mxu0 0
      %843 = vmatpush1.bf16.msra.mxu0 0
      %844 = vmatprep.subr.bf16.mxu0 0
      %845 = vmatpush1.bf16.msra.mxu0 0
      %846 = vmatprep.subr.bf16.mxu0 0
      %847 = vmatpush1.bf16.msra.mxu0 0
      %848 = vmatprep.subr.bf16.mxu0 0
      %849 = vmatpush1.bf16.msra.mxu0 0
      %850 = vmatprep.subr.bf16.mxu0 0
      %851 = vmatpush1.bf16.msra.mxu0 0
      %852 = vmatprep.subr.bf16.mxu0 0
      %853 = vmatpush1.bf16.msra.mxu0 0
      %854 = vmatprep.subr.bf16.mxu0 0
      %855 = vmatpush1.bf16.msra.mxu0 0
      %856 = vmatprep.subr.bf16.mxu0 0
      %857 = vmatpush1.bf16.msra.mxu0 0
      %858 = vmatprep.subr.bf16.mxu0 0
      %859 = vmatpush1.bf16.msra.mxu0 0
      %860 = vmatprep.subr.bf16.mxu0 0
      %861 = vmatpush1.bf16.msra.mxu0 0
      %862 = vmatprep.mubr.bf16.mxu0 0
      %863 = vmatmul.mubr.bf16.gmra.mrb[0].mxu0 %v763
      %v864 = vpop.f32.mrb[0].mxu0
      %v865 = vadd.f32 0.0, %v864
      %v866 = vpop.f32.mrb[0].mxu0
      %v867 = vpop.f32.mrb[0].mxu0
      %v868 = vadd.f32 0.0, %v867
      %v869 = vpop.f32.mrb[0].mxu0
      %870 = vmatprep.mubr.bf16.mxu0 0
      %871 = vmatmul.mubr.bf16.gmra.mrb[0].mxu0 %v766
      %v872 = vpop.f32.mrb[0].mxu0
      %v873 = vadd.f32 0.0, %v872
      %v874 = vpop.f32.mrb[0].mxu0
      %v875 = vpop.f32.mrb[0].mxu0
      %v876 = vadd.f32 0.0, %v875
      %v877 = vpop.f32.mrb[0].mxu0
      %878 = vdwg.mxu0
      %v879 = vadd.f32 %v726, %v812
      %v880 = vadd.f32 %v727, %v814
      %v881 = vadd.f32 %v728, %v865
      %v882 = vadd.f32 %v729, %v816
      %v883 = vadd.f32 %v730, %v818
      %v884 = vadd.f32 %v731, %v868
      %v885 = vadd.f32 %v732, %v822
      %v886 = vadd.f32 %v733, %v824
      %v887 = vadd.f32 %v734, %v873
      %v888 = vadd.f32 %v735, %v826
      %v889 = vadd.f32 %v736, %v828
      %v890 = vadd.f32 %v737, %v876
      %s891 = scalar_lea.vmem %s1, 64
      %v892 = vld [vmem:[%s891] sm:$0xf]
      %v893 = vld [vmem:[%s891 + $0x4] sm:$0xf]
      %v894 = vld [vmem:[%s891 + $0x8] sm:$0xf]
      %v895 = vld [vmem:[%s891 + $0xc] sm:$0xf]
      %v900 = vunpack.c.l.b16 %v892
      %v901 = vunpack.c.l.b16 %v893
      %v902 = vunpack.c.l.b16 %v894
      %v903 = vunpack.c.l.b16 %v895
      %v904 = vpack.c.b16 %v901, %v900
      %v905 = vpack.c.b16 %v903, %v902
      %906 = vrot.lane.b32.xlu0 %v321, 109
      %v907 = vpop.permute.xlu0 %906
      %908 = vrot.lane.b32.xlu0 %v329, 109
      %v909 = vpop.permute.xlu0 %908
      %910 = vrot.lane.b32.xlu0 %v328, 109
      %v911 = vpop.permute.xlu0 %910
      %vm912 = vcmask 891904
      %v913 = vsel %vm912, %v907, %v909
      %v914 = vsel %vm912, %v909, %v911
      %v916 = vsel %vm339, %v904, 0
      %v919 = vsel %vm339, %v905, 0
      %v922 = vsel %vm346, %v913, 0
      %v925 = vsel %vm346, %v914, 0
      %v928 = vsel %vm346, %v911, 0
      %930 = vmatprep.subr.bf16.mxu0 %v925
      %931 = vmatpush1.bf16.msra.mxu0 %v922
      %932 = vmatprep.subr.bf16.mxu0 0
      %933 = vmatpush1.bf16.msra.mxu0 0
      %934 = vmatprep.subr.bf16.mxu0 0
      %935 = vmatpush1.bf16.msra.mxu0 0
      %936 = vmatprep.subr.bf16.mxu0 0
      %937 = vmatpush1.bf16.msra.mxu0 0
      %938 = vmatprep.subr.bf16.mxu0 0
      %939 = vmatpush1.bf16.msra.mxu0 0
      %940 = vmatprep.subr.bf16.mxu0 0
      %941 = vmatpush1.bf16.msra.mxu0 0
      %942 = vmatprep.subr.bf16.mxu0 0
      %943 = vmatpush1.bf16.msra.mxu0 0
      %944 = vmatprep.subr.bf16.mxu0 0
      %945 = vmatpush1.bf16.msra.mxu0 0
      %946 = vmatprep.subr.bf16.mxu0 0
      %947 = vmatpush1.bf16.msra.mxu0 0
      %948 = vmatprep.subr.bf16.mxu0 0
      %949 = vmatpush1.bf16.msra.mxu0 0
      %950 = vmatprep.subr.bf16.mxu0 0
      %951 = vmatpush1.bf16.msra.mxu0 0
      %952 = vmatprep.subr.bf16.mxu0 0
      %953 = vmatpush1.bf16.msra.mxu0 0
      %954 = vmatprep.subr.bf16.mxu0 0
      %955 = vmatpush1.bf16.msra.mxu0 0
      %956 = vmatprep.subr.bf16.mxu0 0
      %957 = vmatpush1.bf16.msra.mxu0 0
      %958 = vmatprep.subr.bf16.mxu0 0
      %959 = vmatpush1.bf16.msra.mxu0 0
      %960 = vmatprep.subr.bf16.mxu0 0
      %961 = vmatpush1.bf16.msra.mxu0 0
      %962 = vmatprep.mubr.bf16.mxu0 0
      %963 = vmatmul.mubr.bf16.gmra.mrb[0].mxu0 %v916
      %v964 = vpop.f32.mrb[0].mxu0
      %v965 = vadd.f32 0.0, %v964
      %v966 = vpop.f32.mrb[0].mxu0
      %v967 = vadd.f32 0.0, %v966
      %v968 = vpop.f32.mrb[0].mxu0
      %v969 = vadd.f32 0.0, %v968
      %v970 = vpop.f32.mrb[0].mxu0
      %v971 = vadd.f32 0.0, %v970
      %972 = vmatprep.mubr.bf16.mxu0 0
      %973 = vmatmul.mubr.bf16.gmra.mrb[0].mxu0 %v919
      %v974 = vpop.f32.mrb[0].mxu0
      %v975 = vadd.f32 0.0, %v974
      %v976 = vpop.f32.mrb[0].mxu0
      %v977 = vadd.f32 0.0, %v976
      %v978 = vpop.f32.mrb[0].mxu0
      %v979 = vadd.f32 0.0, %v978
      %v980 = vpop.f32.mrb[0].mxu0
      %v981 = vadd.f32 0.0, %v980
      %982 = vdwg.mxu0
      %983 = vmatprep.subr.bf16.mxu0 0
      %984 = vmatpush1.bf16.msra.mxu0 %v928
      %985 = vmatprep.subr.bf16.mxu0 0
      %986 = vmatpush1.bf16.msra.mxu0 0
      %987 = vmatprep.subr.bf16.mxu0 0
      %988 = vmatpush1.bf16.msra.mxu0 0
      %989 = vmatprep.subr.bf16.mxu0 0
      %990 = vmatpush1.bf16.msra.mxu0 0
      %991 = vmatprep.subr.bf16.mxu0 0
      %992 = vmatpush1.bf16.msra.mxu0 0
      %993 = vmatprep.subr.bf16.mxu0 0
      %994 = vmatpush1.bf16.msra.mxu0 0
      %995 = vmatprep.subr.bf16.mxu0 0
      %996 = vmatpush1.bf16.msra.mxu0 0
      %997 = vmatprep.subr.bf16.mxu0 0
      %998 = vmatpush1.bf16.msra.mxu0 0
      %999 = vmatprep.subr.bf16.mxu0 0
      %1000 = vmatpush1.bf16.msra.mxu0 0
      %1001 = vmatprep.subr.bf16.mxu0 0
      %1002 = vmatpush1.bf16.msra.mxu0 0
      %1003 = vmatprep.subr.bf16.mxu0 0
      %1004 = vmatpush1.bf16.msra.mxu0 0
      %1005 = vmatprep.subr.bf16.mxu0 0
      %1006 = vmatpush1.bf16.msra.mxu0 0
      %1007 = vmatprep.subr.bf16.mxu0 0
      %1008 = vmatpush1.bf16.msra.mxu0 0
      %1009 = vmatprep.subr.bf16.mxu0 0
      %1010 = vmatpush1.bf16.msra.mxu0 0
      %1011 = vmatprep.subr.bf16.mxu0 0
      %1012 = vmatpush1.bf16.msra.mxu0 0
      %1013 = vmatprep.subr.bf16.mxu0 0
      %1014 = vmatpush1.bf16.msra.mxu0 0
      %1015 = vmatprep.mubr.bf16.mxu0 0
      %1016 = vmatmul.mubr.bf16.gmra.mrb[0].mxu0 %v916
      %v1017 = vpop.f32.mrb[0].mxu0
      %v1018 = vadd.f32 0.0, %v1017
      %v1019 = vpop.f32.mrb[0].mxu0
      %v1020 = vpop.f32.mrb[0].mxu0
      %v1021 = vadd.f32 0.0, %v1020
      %v1022 = vpop.f32.mrb[0].mxu0
      %1023 = vmatprep.mubr.bf16.mxu0 0
      %1024 = vmatmul.mubr.bf16.gmra.mrb[0].mxu0 %v919
      %v1025 = vpop.f32.mrb[0].mxu0
      %v1026 = vadd.f32 0.0, %v1025
      %v1027 = vpop.f32.mrb[0].mxu0
      %v1028 = vpop.f32.mrb[0].mxu0
      %v1029 = vadd.f32 0.0, %v1028
      %v1030 = vpop.f32.mrb[0].mxu0
      %1031 = vdwg.mxu0
      %v1032 = vadd.f32 %v879, %v965
      %v1033 = vadd.f32 %v880, %v967
      %v1034 = vadd.f32 %v881, %v1018
      %v1035 = vadd.f32 %v882, %v969
      %v1036 = vadd.f32 %v883, %v971
      %v1037 = vadd.f32 %v884, %v1021
      %v1038 = vadd.f32 %v885, %v975
      %v1039 = vadd.f32 %v886, %v977
      %v1040 = vadd.f32 %v887, %v1026
      %v1041 = vadd.f32 %v888, %v979
      %v1042 = vadd.f32 %v889, %v981
      %v1043 = vadd.f32 %v890, %v1029
      %s1044 = scalar_lea.vmem %s1, 80
      %v1045 = vld [vmem:[%s1044] sm:$0xf]
      %v1046 = vld [vmem:[%s1044 + $0x4] sm:$0xf]
      %v1047 = vld [vmem:[%s1044 + $0x8] sm:$0xf]
      %v1048 = vld [vmem:[%s1044 + $0xc] sm:$0xf]
      %v1053 = vunpack.c.l.b16 %v1045
      %v1054 = vunpack.c.l.b16 %v1046
      %v1055 = vunpack.c.l.b16 %v1047
      %v1056 = vunpack.c.l.b16 %v1048
      %v1057 = vpack.c.b16 %v1054, %v1053
      %v1058 = vpack.c.b16 %v1056, %v1055
      %1059 = vrot.lane.b32.xlu0 %v321, 108
      %v1060 = vpop.permute.xlu0 %1059
      %1061 = vrot.lane.b32.xlu0 %v329, 108
      %v1062 = vpop.permute.xlu0 %1061
      %1063 = vrot.lane.b32.xlu0 %v328, 108
      %v1064 = vpop.permute.xlu0 %1063
      %vm1065 = vcmask 883712
      %v1066 = vsel %vm1065, %v1060, %v1062
      %v1067 = vsel %vm1065, %v1062, %v1064
      %v1069 = vsel %vm339, %v1057, 0
      %v1072 = vsel %vm339, %v1058, 0
      %v1075 = vsel %vm346, %v1066, 0
      %v1078 = vsel %vm346, %v1067, 0
      %v1081 = vsel %vm346, %v1064, 0
      %1083 = vmatprep.subr.bf16.mxu0 %v1078
      %1084 = vmatpush1.bf16.msra.mxu0 %v1075
      %1085 = vmatprep.subr.bf16.mxu0 0
      %1086 = vmatpush1.bf16.msra.mxu0 0
      %1087 = vmatprep.subr.bf16.mxu0 0
      %1088 = vmatpush1.bf16.msra.mxu0 0
      %1089 = vmatprep.subr.bf16.mxu0 0
      %1090 = vmatpush1.bf16.msra.mxu0 0
      %1091 = vmatprep.subr.bf16.mxu0 0
      %1092 = vmatpush1.bf16.msra.mxu0 0
      %1093 = vmatprep.subr.bf16.mxu0 0
      %1094 = vmatpush1.bf16.msra.mxu0 0
      %1095 = vmatprep.subr.bf16.mxu0 0
      %1096 = vmatpush1.bf16.msra.mxu0 0
      %1097 = vmatprep.subr.bf16.mxu0 0
      %1098 = vmatpush1.bf16.msra.mxu0 0
      %1099 = vmatprep.subr.bf16.mxu0 0
      %1100 = vmatpush1.bf16.msra.mxu0 0
      %1101 = vmatprep.subr.bf16.mxu0 0
      %1102 = vmatpush1.bf16.msra.mxu0 0
      %1103 = vmatprep.subr.bf16.mxu0 0
      %1104 = vmatpush1.bf16.msra.mxu0 0
      %1105 = vmatprep.subr.bf16.mxu0 0
      %1106 = vmatpush1.bf16.msra.mxu0 0
      %1107 = vmatprep.subr.bf16.mxu0 0
      %1108 = vmatpush1.bf16.msra.mxu0 0
      %1109 = vmatprep.subr.bf16.mxu0 0
      %1110 = vmatpush1.bf16.msra.mxu0 0
      %1111 = vmatprep.subr.bf16.mxu0 0
      %1112 = vmatpush1.bf16.msra.mxu0 0
      %1113 = vmatprep.subr.bf16.mxu0 0
      %1114 = vmatpush1.bf16.msra.mxu0 0
      %1115 = vmatprep.mubr.bf16.mxu0 0
      %1116 = vmatmul.mubr.bf16.gmra.mrb[0].mxu0 %v1069
      %v1117 = vpop.f32.mrb[0].mxu0
      %v1118 = vadd.f32 0.0, %v1117
      %v1119 = vpop.f32.mrb[0].mxu0
      %v1120 = vadd.f32 0.0, %v1119
      %v1121 = vpop.f32.mrb[0].mxu0
      %v1122 = vadd.f32 0.0, %v1121
      %v1123 = vpop.f32.mrb[0].mxu0
      %v1124 = vadd.f32 0.0, %v1123
      %1125 = vmatprep.mubr.bf16.mxu0 0
      %1126 = vmatmul.mubr.bf16.gmra.mrb[0].mxu0 %v1072
      %v1127 = vpop.f32.mrb[0].mxu0
      %v1128 = vadd.f32 0.0, %v1127
      %v1129 = vpop.f32.mrb[0].mxu0
      %v1130 = vadd.f32 0.0, %v1129
      %v1131 = vpop.f32.mrb[0].mxu0
      %v1132 = vadd.f32 0.0, %v1131
      %v1133 = vpop.f32.mrb[0].mxu0
      %v1134 = vadd.f32 0.0, %v1133
      %1135 = vdwg.mxu0
      %1136 = vmatprep.subr.bf16.mxu0 0
      %1137 = vmatpush1.bf16.msra.mxu0 %v1081
      %1138 = vmatprep.subr.bf16.mxu0 0
      %1139 = vmatpush1.bf16.msra.mxu0 0
      %1140 = vmatprep.subr.bf16.mxu0 0
      %1141 = vmatpush1.bf16.msra.mxu0 0
      %1142 = vmatprep.subr.bf16.mxu0 0
      %1143 = vmatpush1.bf16.msra.mxu0 0
      %1144 = vmatprep.subr.bf16.mxu0 0
      %1145 = vmatpush1.bf16.msra.mxu0 0
      %1146 = vmatprep.subr.bf16.mxu0 0
      %1147 = vmatpush1.bf16.msra.mxu0 0
      %1148 = vmatprep.subr.bf16.mxu0 0
      %1149 = vmatpush1.bf16.msra.mxu0 0
      %1150 = vmatprep.subr.bf16.mxu0 0
      %1151 = vmatpush1.bf16.msra.mxu0 0
      %1152 = vmatprep.subr.bf16.mxu0 0
      %1153 = vmatpush1.bf16.msra.mxu0 0
      %1154 = vmatprep.subr.bf16.mxu0 0
      %1155 = vmatpush1.bf16.msra.mxu0 0
      %1156 = vmatprep.subr.bf16.mxu0 0
      %1157 = vmatpush1.bf16.msra.mxu0 0
      %1158 = vmatprep.subr.bf16.mxu0 0
      %1159 = vmatpush1.bf16.msra.mxu0 0
      %1160 = vmatprep.subr.bf16.mxu0 0
      %1161 = vmatpush1.bf16.msra.mxu0 0
      %1162 = vmatprep.subr.bf16.mxu0 0
      %1163 = vmatpush1.bf16.msra.mxu0 0
      %1164 = vmatprep.subr.bf16.mxu0 0
      %1165 = vmatpush1.bf16.msra.mxu0 0
      %1166 = vmatprep.subr.bf16.mxu0 0
      %1167 = vmatpush1.bf16.msra.mxu0 0
      %1168 = vmatprep.mubr.bf16.mxu0 0
      %1169 = vmatmul.mubr.bf16.gmra.mrb[0].mxu0 %v1069
      %v1170 = vpop.f32.mrb[0].mxu0
      %v1171 = vadd.f32 0.0, %v1170
      %v1172 = vpop.f32.mrb[0].mxu0
      %v1173 = vpop.f32.mrb[0].mxu0
      %v1174 = vadd.f32 0.0, %v1173
      %v1175 = vpop.f32.mrb[0].mxu0
      %1176 = vmatprep.mubr.bf16.mxu0 0
      %1177 = vmatmul.mubr.bf16.gmra.mrb[0].mxu0 %v1072
      %v1178 = vpop.f32.mrb[0].mxu0
      %v1179 = vadd.f32 0.0, %v1178
      %v1180 = vpop.f32.mrb[0].mxu0
      %v1181 = vpop.f32.mrb[0].mxu0
      %v1182 = vadd.f32 0.0, %v1181
      %v1183 = vpop.f32.mrb[0].mxu0
      %1184 = vdwg.mxu0
      %v1185 = vadd.f32 %v1032, %v1118
      %v1186 = vadd.f32 %v1033, %v1120
      %v1187 = vadd.f32 %v1034, %v1171
      %v1188 = vadd.f32 %v1035, %v1122
      %v1189 = vadd.f32 %v1036, %v1124
      %v1190 = vadd.f32 %v1037, %v1174
      %v1191 = vadd.f32 %v1038, %v1128
      %v1192 = vadd.f32 %v1039, %v1130
      %v1193 = vadd.f32 %v1040, %v1179
      %v1194 = vadd.f32 %v1041, %v1132
      %v1195 = vadd.f32 %v1042, %v1134
      %v1196 = vadd.f32 %v1043, %v1182
      %s1197 = scalar_lea.vmem %s1, 96
      %v1198 = vld [vmem:[%s1197] sm:$0xf]
      %v1199 = vld [vmem:[%s1197 + $0x4] sm:$0xf]
      %v1200 = vld [vmem:[%s1197 + $0x8] sm:$0xf]
      %v1201 = vld [vmem:[%s1197 + $0xc] sm:$0xf]
      %v1206 = vunpack.c.l.b16 %v1198
      %v1207 = vunpack.c.l.b16 %v1199
      %v1208 = vunpack.c.l.b16 %v1200
      %v1209 = vunpack.c.l.b16 %v1201
      %v1210 = vpack.c.b16 %v1207, %v1206
      %v1211 = vpack.c.b16 %v1209, %v1208
      %1212 = vrot.lane.b32.xlu0 %v321, 92
      %v1213 = vpop.permute.xlu0 %1212
      %1214 = vrot.lane.b32.xlu0 %v329, 92
      %v1215 = vpop.permute.xlu0 %1214
      %1216 = vrot.lane.b32.xlu0 %v328, 92
      %v1217 = vpop.permute.xlu0 %1216
      %vm1218 = vcmask 752640
      %v1219 = vsel %vm1218, %v1213, %v1215
      %v1220 = vsel %vm1218, %v1215, %v1217
      %v1222 = vsel %vm339, %v1210, 0
      %v1225 = vsel %vm339, %v1211, 0
      %v1228 = vsel %vm346, %v1219, 0
      %v1231 = vsel %vm346, %v1220, 0
      %v1234 = vsel %vm346, %v1217, 0
      %1236 = vmatprep.subr.bf16.mxu0 %v1231
      %1237 = vmatpush1.bf16.msra.mxu0 %v1228
      %1238 = vmatprep.subr.bf16.mxu0 0
      %1239 = vmatpush1.bf16.msra.mxu0 0
      %1240 = vmatprep.subr.bf16.mxu0 0
      %1241 = vmatpush1.bf16.msra.mxu0 0
      %1242 = vmatprep.subr.bf16.mxu0 0
      %1243 = vmatpush1.bf16.msra.mxu0 0
      %1244 = vmatprep.subr.bf16.mxu0 0
      %1245 = vmatpush1.bf16.msra.mxu0 0
      %1246 = vmatprep.subr.bf16.mxu0 0
      %1247 = vmatpush1.bf16.msra.mxu0 0
      %1248 = vmatprep.subr.bf16.mxu0 0
      %1249 = vmatpush1.bf16.msra.mxu0 0
      %1250 = vmatprep.subr.bf16.mxu0 0
      %1251 = vmatpush1.bf16.msra.mxu0 0
      %1252 = vmatprep.subr.bf16.mxu0 0
      %1253 = vmatpush1.bf16.msra.mxu0 0
      %1254 = vmatprep.subr.bf16.mxu0 0
      %1255 = vmatpush1.bf16.msra.mxu0 0
      %1256 = vmatprep.subr.bf16.mxu0 0
      %1257 = vmatpush1.bf16.msra.mxu0 0
      %1258 = vmatprep.subr.bf16.mxu0 0
      %1259 = vmatpush1.bf16.msra.mxu0 0
      %1260 = vmatprep.subr.bf16.mxu0 0
      %1261 = vmatpush1.bf16.msra.mxu0 0
      %1262 = vmatprep.subr.bf16.mxu0 0
      %1263 = vmatpush1.bf16.msra.mxu0 0
      %1264 = vmatprep.subr.bf16.mxu0 0
      %1265 = vmatpush1.bf16.msra.mxu0 0
      %1266 = vmatprep.subr.bf16.mxu0 0
      %1267 = vmatpush1.bf16.msra.mxu0 0
      %1268 = vmatprep.mubr.bf16.mxu0 0
      %1269 = vmatmul.mubr.bf16.gmra.mrb[0].mxu0 %v1222
      %v1270 = vpop.f32.mrb[0].mxu0
      %v1271 = vadd.f32 0.0, %v1270
      %v1272 = vpop.f32.mrb[0].mxu0
      %v1273 = vadd.f32 0.0, %v1272
      %v1274 = vpop.f32.mrb[0].mxu0
      %v1275 = vadd.f32 0.0, %v1274
      %v1276 = vpop.f32.mrb[0].mxu0
      %v1277 = vadd.f32 0.0, %v1276
      %1278 = vmatprep.mubr.bf16.mxu0 0
      %1279 = vmatmul.mubr.bf16.gmra.mrb[0].mxu0 %v1225
      %v1280 = vpop.f32.mrb[0].mxu0
      %v1281 = vadd.f32 0.0, %v1280
      %v1282 = vpop.f32.mrb[0].mxu0
      %v1283 = vadd.f32 0.0, %v1282
      %v1284 = vpop.f32.mrb[0].mxu0
      %v1285 = vadd.f32 0.0, %v1284
      %v1286 = vpop.f32.mrb[0].mxu0
      %v1287 = vadd.f32 0.0, %v1286
      %1288 = vdwg.mxu0
      %1289 = vmatprep.subr.bf16.mxu0 0
      %1290 = vmatpush1.bf16.msra.mxu0 %v1234
      %1291 = vmatprep.subr.bf16.mxu0 0
      %1292 = vmatpush1.bf16.msra.mxu0 0
      %1293 = vmatprep.subr.bf16.mxu0 0
      %1294 = vmatpush1.bf16.msra.mxu0 0
      %1295 = vmatprep.subr.bf16.mxu0 0
      %1296 = vmatpush1.bf16.msra.mxu0 0
      %1297 = vmatprep.subr.bf16.mxu0 0
      %1298 = vmatpush1.bf16.msra.mxu0 0
      %1299 = vmatprep.subr.bf16.mxu0 0
      %1300 = vmatpush1.bf16.msra.mxu0 0
      %1301 = vmatprep.subr.bf16.mxu0 0
      %1302 = vmatpush1.bf16.msra.mxu0 0
      %1303 = vmatprep.subr.bf16.mxu0 0
      %1304 = vmatpush1.bf16.msra.mxu0 0
      %1305 = vmatprep.subr.bf16.mxu0 0
      %1306 = vmatpush1.bf16.msra.mxu0 0
      %1307 = vmatprep.subr.bf16.mxu0 0
      %1308 = vmatpush1.bf16.msra.mxu0 0
      %1309 = vmatprep.subr.bf16.mxu0 0
      %1310 = vmatpush1.bf16.msra.mxu0 0
      %1311 = vmatprep.subr.bf16.mxu0 0
      %1312 = vmatpush1.bf16.msra.mxu0 0
      %1313 = vmatprep.subr.bf16.mxu0 0
      %1314 = vmatpush1.bf16.msra.mxu0 0
      %1315 = vmatprep.subr.bf16.mxu0 0
      %1316 = vmatpush1.bf16.msra.mxu0 0
      %1317 = vmatprep.subr.bf16.mxu0 0
      %1318 = vmatpush1.bf16.msra.mxu0 0
      %1319 = vmatprep.subr.bf16.mxu0 0
      %1320 = vmatpush1.bf16.msra.mxu0 0
      %1321 = vmatprep.mubr.bf16.mxu0 0
      %1322 = vmatmul.mubr.bf16.gmra.mrb[0].mxu0 %v1222
      %v1323 = vpop.f32.mrb[0].mxu0
      %v1324 = vadd.f32 0.0, %v1323
      %v1325 = vpop.f32.mrb[0].mxu0
      %v1326 = vpop.f32.mrb[0].mxu0
      %v1327 = vadd.f32 0.0, %v1326
      %v1328 = vpop.f32.mrb[0].mxu0
      %1329 = vmatprep.mubr.bf16.mxu0 0
      %1330 = vmatmul.mubr.bf16.gmra.mrb[0].mxu0 %v1225
      %v1331 = vpop.f32.mrb[0].mxu0
      %v1332 = vadd.f32 0.0, %v1331
      %v1333 = vpop.f32.mrb[0].mxu0
      %v1334 = vpop.f32.mrb[0].mxu0
      %v1335 = vadd.f32 0.0, %v1334
      %v1336 = vpop.f32.mrb[0].mxu0
      %1337 = vdwg.mxu0
      %v1338 = vadd.f32 %v1185, %v1271
      %v1339 = vadd.f32 %v1186, %v1273
      %v1340 = vadd.f32 %v1187, %v1324
      %v1341 = vadd.f32 %v1188, %v1275
      %v1342 = vadd.f32 %v1189, %v1277
      %v1343 = vadd.f32 %v1190, %v1327
      %v1344 = vadd.f32 %v1191, %v1281
      %v1345 = vadd.f32 %v1192, %v1283
      %v1346 = vadd.f32 %v1193, %v1332
      %v1347 = vadd.f32 %v1194, %v1285
      %v1348 = vadd.f32 %v1195, %v1287
      %v1349 = vadd.f32 %v1196, %v1335
      %s1350 = scalar_lea.vmem %s1, 112
      %v1351 = vld [vmem:[%s1350] sm:$0xf]
      %v1352 = vld [vmem:[%s1350 + $0x4] sm:$0xf]
      %v1353 = vld [vmem:[%s1350 + $0x8] sm:$0xf]
      %v1354 = vld [vmem:[%s1350 + $0xc] sm:$0xf]
      %v1359 = vunpack.c.l.b16 %v1351
      %v1360 = vunpack.c.l.b16 %v1352
      %v1361 = vunpack.c.l.b16 %v1353
      %v1362 = vunpack.c.l.b16 %v1354
      %v1363 = vpack.c.b16 %v1360, %v1359
      %v1364 = vpack.c.b16 %v1362, %v1361
      %1365 = vrot.lane.b32.xlu0 %v321, 91
      %v1366 = vpop.permute.xlu0 %1365
      %1367 = vrot.lane.b32.xlu0 %v329, 91
      %v1368 = vpop.permute.xlu0 %1367
      %1369 = vrot.lane.b32.xlu0 %v328, 91
      %v1370 = vpop.permute.xlu0 %1369
      %vm1371 = vcmask 744448
      %v1372 = vsel %vm1371, %v1366, %v1368
      %v1373 = vsel %vm1371, %v1368, %v1370
      %v1375 = vsel %vm339, %v1363, 0
      %v1378 = vsel %vm339, %v1364, 0
      %v1381 = vsel %vm346, %v1372, 0
      %v1384 = vsel %vm346, %v1373, 0
      %v1387 = vsel %vm346, %v1370, 0
      %1389 = vmatprep.subr.bf16.mxu0 %v1384
      %1390 = vmatpush1.bf16.msra.mxu0 %v1381
      %1391 = vmatprep.subr.bf16.mxu0 0
      %1392 = vmatpush1.bf16.msra.mxu0 0
      %1393 = vmatprep.subr.bf16.mxu0 0
      %1394 = vmatpush1.bf16.msra.mxu0 0
      %1395 = vmatprep.subr.bf16.mxu0 0
      %1396 = vmatpush1.bf16.msra.mxu0 0
      %1397 = vmatprep.subr.bf16.mxu0 0
      %1398 = vmatpush1.bf16.msra.mxu0 0
      %1399 = vmatprep.subr.bf16.mxu0 0
      %1400 = vmatpush1.bf16.msra.mxu0 0
      %1401 = vmatprep.subr.bf16.mxu0 0
      %1402 = vmatpush1.bf16.msra.mxu0 0
      %1403 = vmatprep.subr.bf16.mxu0 0
      %1404 = vmatpush1.bf16.msra.mxu0 0
      %1405 = vmatprep.subr.bf16.mxu0 0
      %1406 = vmatpush1.bf16.msra.mxu0 0
      %1407 = vmatprep.subr.bf16.mxu0 0
      %1408 = vmatpush1.bf16.msra.mxu0 0
      %1409 = vmatprep.subr.bf16.mxu0 0
      %1410 = vmatpush1.bf16.msra.mxu0 0
      %1411 = vmatprep.subr.bf16.mxu0 0
      %1412 = vmatpush1.bf16.msra.mxu0 0
      %1413 = vmatprep.subr.bf16.mxu0 0
      %1414 = vmatpush1.bf16.msra.mxu0 0
      %1415 = vmatprep.subr.bf16.mxu0 0
      %1416 = vmatpush1.bf16.msra.mxu0 0
      %1417 = vmatprep.subr.bf16.mxu0 0
      %1418 = vmatpush1.bf16.msra.mxu0 0
      %1419 = vmatprep.subr.bf16.mxu0 0
      %1420 = vmatpush1.bf16.msra.mxu0 0
      %1421 = vmatprep.mubr.bf16.mxu0 0
      %1422 = vmatmul.mubr.bf16.gmra.mrb[0].mxu0 %v1375
      %v1423 = vpop.f32.mrb[0].mxu0
      %v1424 = vadd.f32 0.0, %v1423
      %v1425 = vpop.f32.mrb[0].mxu0
      %v1426 = vadd.f32 0.0, %v1425
      %v1427 = vpop.f32.mrb[0].mxu0
      %v1428 = vadd.f32 0.0, %v1427
      %v1429 = vpop.f32.mrb[0].mxu0
      %v1430 = vadd.f32 0.0, %v1429
      %1431 = vmatprep.mubr.bf16.mxu0 0
      %1432 = vmatmul.mubr.bf16.gmra.mrb[0].mxu0 %v1378
      %v1433 = vpop.f32.mrb[0].mxu0
      %v1434 = vadd.f32 0.0, %v1433
      %v1435 = vpop.f32.mrb[0].mxu0
      %v1436 = vadd.f32 0.0, %v1435
      %v1437 = vpop.f32.mrb[0].mxu0
      %v1438 = vadd.f32 0.0, %v1437
      %v1439 = vpop.f32.mrb[0].mxu0
      %v1440 = vadd.f32 0.0, %v1439
      %1441 = vdwg.mxu0
      %1442 = vmatprep.subr.bf16.mxu0 0
      %1443 = vmatpush1.bf16.msra.mxu0 %v1387
      %1444 = vmatprep.subr.bf16.mxu0 0
      %1445 = vmatpush1.bf16.msra.mxu0 0
      %1446 = vmatprep.subr.bf16.mxu0 0
      %1447 = vmatpush1.bf16.msra.mxu0 0
      %1448 = vmatprep.subr.bf16.mxu0 0
      %1449 = vmatpush1.bf16.msra.mxu0 0
      %1450 = vmatprep.subr.bf16.mxu0 0
      %1451 = vmatpush1.bf16.msra.mxu0 0
      %1452 = vmatprep.subr.bf16.mxu0 0
      %1453 = vmatpush1.bf16.msra.mxu0 0
      %1454 = vmatprep.subr.bf16.mxu0 0
      %1455 = vmatpush1.bf16.msra.mxu0 0
      %1456 = vmatprep.subr.bf16.mxu0 0
      %1457 = vmatpush1.bf16.msra.mxu0 0
      %1458 = vmatprep.subr.bf16.mxu0 0
      %1459 = vmatpush1.bf16.msra.mxu0 0
      %1460 = vmatprep.subr.bf16.mxu0 0
      %1461 = vmatpush1.bf16.msra.mxu0 0
      %1462 = vmatprep.subr.bf16.mxu0 0
      %1463 = vmatpush1.bf16.msra.mxu0 0
      %1464 = vmatprep.subr.bf16.mxu0 0
      %1465 = vmatpush1.bf16.msra.mxu0 0
      %1466 = vmatprep.subr.bf16.mxu0 0
      %1467 = vmatpush1.bf16.msra.mxu0 0
      %1468 = vmatprep.subr.bf16.mxu0 0
      %1469 = vmatpush1.bf16.msra.mxu0 0
      %1470 = vmatprep.subr.bf16.mxu0 0
      %1471 = vmatpush1.bf16.msra.mxu0 0
      %1472 = vmatprep.subr.bf16.mxu0 0
      %1473 = vmatpush1.bf16.msra.mxu0 0
      %1474 = vmatprep.mubr.bf16.mxu0 0
      %1475 = vmatmul.mubr.bf16.gmra.mrb[0].mxu0 %v1375
      %v1476 = vpop.f32.mrb[0].mxu0
      %v1477 = vadd.f32 0.0, %v1476
      %v1478 = vpop.f32.mrb[0].mxu0
      %v1479 = vpop.f32.mrb[0].mxu0
      %v1480 = vadd.f32 0.0, %v1479
      %v1481 = vpop.f32.mrb[0].mxu0
      %1482 = vmatprep.mubr.bf16.mxu0 0
      %1483 = vmatmul.mubr.bf16.gmra.mrb[0].mxu0 %v1378
      %v1484 = vpop.f32.mrb[0].mxu0
      %v1485 = vadd.f32 0.0, %v1484
      %v1486 = vpop.f32.mrb[0].mxu0
      %v1487 = vpop.f32.mrb[0].mxu0
      %v1488 = vadd.f32 0.0, %v1487
      %v1489 = vpop.f32.mrb[0].mxu0
      %1490 = vdwg.mxu0
      %v1491 = vadd.f32 %v1338, %v1424
      %v1492 = vadd.f32 %v1339, %v1426
      %v1493 = vadd.f32 %v1340, %v1477
      %v1494 = vadd.f32 %v1341, %v1428
      %v1495 = vadd.f32 %v1342, %v1430
      %v1496 = vadd.f32 %v1343, %v1480
      %v1497 = vadd.f32 %v1344, %v1434
      %v1498 = vadd.f32 %v1345, %v1436
      %v1499 = vadd.f32 %v1346, %v1485
      %v1500 = vadd.f32 %v1347, %v1438
      %v1501 = vadd.f32 %v1348, %v1440
      %v1502 = vadd.f32 %v1349, %v1488
      %s1503 = scalar_lea.vmem %s1, 128
      %v1504 = vld [vmem:[%s1503] sm:$0xf]
      %v1505 = vld [vmem:[%s1503 + $0x4] sm:$0xf]
      %v1506 = vld [vmem:[%s1503 + $0x8] sm:$0xf]
      %v1507 = vld [vmem:[%s1503 + $0xc] sm:$0xf]
      %v1512 = vunpack.c.l.b16 %v1504
      %v1513 = vunpack.c.l.b16 %v1505
      %v1514 = vunpack.c.l.b16 %v1506
      %v1515 = vunpack.c.l.b16 %v1507
      %v1516 = vpack.c.b16 %v1513, %v1512
      %v1517 = vpack.c.b16 %v1515, %v1514
      %1518 = vrot.lane.b32.xlu0 %v321, 90
      %v1519 = vpop.permute.xlu0 %1518
      %1520 = vrot.lane.b32.xlu0 %v329, 90
      %v1521 = vpop.permute.xlu0 %1520
      %1522 = vrot.lane.b32.xlu0 %v328, 90
      %v1523 = vpop.permute.xlu0 %1522
      %vm1524 = vcmask 736256
      %v1525 = vsel %vm1524, %v1519, %v1521
      %v1526 = vsel %vm1524, %v1521, %v1523
      %v1528 = vsel %vm339, %v1516, 0
      %v1531 = vsel %vm339, %v1517, 0
      %v1534 = vsel %vm346, %v1525, 0
      %v1537 = vsel %vm346, %v1526, 0
      %v1540 = vsel %vm346, %v1523, 0
      %1542 = vmatprep.subr.bf16.mxu0 %v1537
      %1543 = vmatpush1.bf16.msra.mxu0 %v1534
      %1544 = vmatprep.subr.bf16.mxu0 0
      %1545 = vmatpush1.bf16.msra.mxu0 0
      %1546 = vmatprep.subr.bf16.mxu0 0
      %1547 = vmatpush1.bf16.msra.mxu0 0
      %1548 = vmatprep.subr.bf16.mxu0 0
      %1549 = vmatpush1.bf16.msra.mxu0 0
      %1550 = vmatprep.subr.bf16.mxu0 0
      %1551 = vmatpush1.bf16.msra.mxu0 0
      %1552 = vmatprep.subr.bf16.mxu0 0
      %1553 = vmatpush1.bf16.msra.mxu0 0
      %1554 = vmatprep.subr.bf16.mxu0 0
      %1555 = vmatpush1.bf16.msra.mxu0 0
      %1556 = vmatprep.subr.bf16.mxu0 0
      %1557 = vmatpush1.bf16.msra.mxu0 0
      %1558 = vmatprep.subr.bf16.mxu0 0
      %1559 = vmatpush1.bf16.msra.mxu0 0
      %1560 = vmatprep.subr.bf16.mxu0 0
      %1561 = vmatpush1.bf16.msra.mxu0 0
      %1562 = vmatprep.subr.bf16.mxu0 0
      %1563 = vmatpush1.bf16.msra.mxu0 0
      %1564 = vmatprep.subr.bf16.mxu0 0
      %1565 = vmatpush1.bf16.msra.mxu0 0
      %1566 = vmatprep.subr.bf16.mxu0 0
      %1567 = vmatpush1.bf16.msra.mxu0 0
      %1568 = vmatprep.subr.bf16.mxu0 0
      %1569 = vmatpush1.bf16.msra.mxu0 0
      %1570 = vmatprep.subr.bf16.mxu0 0
      %1571 = vmatpush1.bf16.msra.mxu0 0
      %1572 = vmatprep.subr.bf16.mxu0 0
      %1573 = vmatpush1.bf16.msra.mxu0 0
      %1574 = vmatprep.mubr.bf16.mxu0 0
      %1575 = vmatmul.mubr.bf16.gmra.mrb[0].mxu0 %v1528
      %v1576 = vpop.f32.mrb[0].mxu0
      %v1577 = vadd.f32 0.0, %v1576
      %v1578 = vpop.f32.mrb[0].mxu0
      %v1579 = vadd.f32 0.0, %v1578
      %v1580 = vpop.f32.mrb[0].mxu0
      %v1581 = vadd.f32 0.0, %v1580
      %v1582 = vpop.f32.mrb[0].mxu0
      %v1583 = vadd.f32 0.0, %v1582
      %1584 = vmatprep.mubr.bf16.mxu0 0
      %1585 = vmatmul.mubr.bf16.gmra.mrb[0].mxu0 %v1531
      %v1586 = vpop.f32.mrb[0].mxu0
      %v1587 = vadd.f32 0.0, %v1586
      %v1588 = vpop.f32.mrb[0].mxu0
      %v1589 = vadd.f32 0.0, %v1588
      %v1590 = vpop.f32.mrb[0].mxu0
      %v1591 = vadd.f32 0.0, %v1590
      %v1592 = vpop.f32.mrb[0].mxu0
      %v1593 = vadd.f32 0.0, %v1592
      %1594 = vdwg.mxu0
      %1595 = vmatprep.subr.bf16.mxu0 0
      %1596 = vmatpush1.bf16.msra.mxu0 %v1540
      %1597 = vmatprep.subr.bf16.mxu0 0
      %1598 = vmatpush1.bf16.msra.mxu0 0
      %1599 = vmatprep.subr.bf16.mxu0 0
      %1600 = vmatpush1.bf16.msra.mxu0 0
      %1601 = vmatprep.subr.bf16.mxu0 0
      %1602 = vmatpush1.bf16.msra.mxu0 0
      %1603 = vmatprep.subr.bf16.mxu0 0
      %1604 = vmatpush1.bf16.msra.mxu0 0
      %1605 = vmatprep.subr.bf16.mxu0 0
      %1606 = vmatpush1.bf16.msra.mxu0 0
      %1607 = vmatprep.subr.bf16.mxu0 0
      %1608 = vmatpush1.bf16.msra.mxu0 0
      %1609 = vmatprep.subr.bf16.mxu0 0
      %1610 = vmatpush1.bf16.msra.mxu0 0
      %1611 = vmatprep.subr.bf16.mxu0 0
      %1612 = vmatpush1.bf16.msra.mxu0 0
      %1613 = vmatprep.subr.bf16.mxu0 0
      %1614 = vmatpush1.bf16.msra.mxu0 0
      %1615 = vmatprep.subr.bf16.mxu0 0
      %1616 = vmatpush1.bf16.msra.mxu0 0
      %1617 = vmatprep.subr.bf16.mxu0 0
      %1618 = vmatpush1.bf16.msra.mxu0 0
      %1619 = vmatprep.subr.bf16.mxu0 0
      %1620 = vmatpush1.bf16.msra.mxu0 0
      %1621 = vmatprep.subr.bf16.mxu0 0
      %1622 = vmatpush1.bf16.msra.mxu0 0
      %1623 = vmatprep.subr.bf16.mxu0 0
      %1624 = vmatpush1.bf16.msra.mxu0 0
      %1625 = vmatprep.subr.bf16.mxu0 0
      %1626 = vmatpush1.bf16.msra.mxu0 0
      %1627 = vmatprep.mubr.bf16.mxu0 0
      %1628 = vmatmul.mubr.bf16.gmra.mrb[0].mxu0 %v1528
      %v1629 = vpop.f32.mrb[0].mxu0
      %v1630 = vadd.f32 0.0, %v1629
      %v1631 = vpop.f32.mrb[0].mxu0
      %v1632 = vpop.f32.mrb[0].mxu0
      %v1633 = vadd.f32 0.0, %v1632
      %v1634 = vpop.f32.mrb[0].mxu0
      %1635 = vmatprep.mubr.bf16.mxu0 0
      %1636 = vmatmul.mubr.bf16.gmra.mrb[0].mxu0 %v1531
      %v1637 = vpop.f32.mrb[0].mxu0
      %v1638 = vadd.f32 0.0, %v1637
      %v1639 = vpop.f32.mrb[0].mxu0
      %v1640 = vpop.f32.mrb[0].mxu0
      %v1641 = vadd.f32 0.0, %v1640
      %v1642 = vpop.f32.mrb[0].mxu0
      %1643 = vdwg.mxu0
      %v1644 = vadd.f32 %v1491, %v1577
      %v1645 = vadd.f32 %v1492, %v1579
      %v1646 = vadd.f32 %v1493, %v1630
      %v1647 = vadd.f32 %v1494, %v1581
      %v1648 = vadd.f32 %v1495, %v1583
      %v1649 = vadd.f32 %v1496, %v1633
      %v1650 = vadd.f32 %v1497, %v1587
      %v1651 = vadd.f32 %v1498, %v1589
      %v1652 = vadd.f32 %v1499, %v1638
      %v1653 = vadd.f32 %v1500, %v1591
      %v1654 = vadd.f32 %v1501, %v1593
      %v1655 = vadd.f32 %v1502, %v1641
      %v1656 = vld [vmem:[%s2] sm:$0xff]
      %v1657 = vld [vmem:[%s2 + $0x8] sm:$0xff]
      %v1658 = vld [vmem:[%s2 + $0x10] sm:$0xff]
      %v1659 = vld [vmem:[%s2 + $0x18] sm:$0xff]
      %1661 = vset.pattern.permute.xlu0 0
      %1662 = vperm.xlu0 %1661, %v1656
      %v1663 = vpop.permute.xlu0 %1662
      %1666 = vset.pattern.permute.xlu0 0
      %1667 = vperm.xlu0 %1666, %v1657
      %v1668 = vpop.permute.xlu0 %1667
      %1671 = vset.pattern.permute.xlu0 0
      %1672 = vperm.xlu0 %1671, %v1658
      %v1673 = vpop.permute.xlu0 %1672
      %1676 = vset.pattern.permute.xlu0 0
      %1677 = vperm.xlu0 %1676, %v1659
      %v1678 = vpop.permute.xlu0 %1677
      %v1680 = vadd.f32 %v1644, %v1663
      %v1681 = vadd.f32 %v1645, %v1663
      %v1682 = vadd.f32 %v1646, %v1663
      %v1683 = vadd.f32 %v1647, %v1668
      %v1684 = vadd.f32 %v1648, %v1668
      %v1685 = vadd.f32 %v1649, %v1668
      %v1686 = vadd.f32 %v1650, %v1673
      %v1687 = vadd.f32 %v1651, %v1673
      %v1688 = vadd.f32 %v1652, %v1673
      %v1689 = vadd.f32 %v1653, %v1678
      %v1690 = vadd.f32 %v1654, %v1678
      %v1691 = vadd.f32 %v1655, %v1678
      %v1692 = vmax.f32 %v1680, 0.0
      %v1693 = vmax.f32 %v1681, 0.0
      %v1694 = vmax.f32 %v1682, 0.0
      %v1695 = vmax.f32 %v1683, 0.0
      %v1696 = vmax.f32 %v1684, 0.0
      %v1697 = vmax.f32 %v1685, 0.0
      %v1698 = vmax.f32 %v1686, 0.0
      %v1699 = vmax.f32 %v1687, 0.0
      %v1700 = vmax.f32 %v1688, 0.0
      %v1701 = vmax.f32 %v1689, 0.0
      %v1702 = vmax.f32 %v1690, 0.0
      %v1703 = vmax.f32 %v1691, 0.0
      %v1704 = vld [vmem:[%s5] sm:$0x7]
      %v1706 = vlaneseq
      %v1707 = vshrl.u32 %v1706, 7
      %v1708 = vsub.s32 0, %v1707
      %v1709 = vrot.slane %v1704, %v1708
      %v1710 = vlaneseq
      %v1711 = vshrl.u32 %v1710, 7
      %v1712 = vsub.s32 1, %v1711
      %v1713 = vrot.slane %v1704, %v1712
      %v1714 = vlaneseq
      %v1715 = vshrl.u32 %v1714, 7
      %v1716 = vsub.s32 2, %v1715
      %v1717 = vrot.slane %v1704, %v1716
      %v1721 = vmul.f32 %v1692, %v1709
      %v1722 = vmul.f32 %v1693, %v1713
      %v1723 = vmul.f32 %v1694, %v1717
      %v1724 = vmul.f32 %v1695, %v1709
      %v1725 = vmul.f32 %v1696, %v1713
      %v1726 = vmul.f32 %v1697, %v1717
      %v1727 = vmul.f32 %v1698, %v1709
      %v1728 = vmul.f32 %v1699, %v1713
      %v1729 = vmul.f32 %v1700, %v1717
      %v1730 = vmul.f32 %v1701, %v1709
      %v1731 = vmul.f32 %v1702, %v1713
      %v1732 = vmul.f32 %v1703, %v1717
      %v1733 = vadd.f32 %v1721, %v1722
      %vm1734 = vcmask 261120
      %v1735 = vsel %vm1734, %v1723, 0.0
      %v1736 = vadd.f32 %v1733, %v1735
      %1737 = vadd.xlane.f32.xlu0 %v1736
      %v1738 = vpop.xlane.xlu0 %1737
      %v1739 = vadd.f32 %v1724, %v1725
      %v1740 = vsel %vm1734, %v1726, 0.0
      %v1741 = vadd.f32 %v1739, %v1740
      %1742 = vadd.xlane.f32.xlu0 %v1741
      %v1743 = vpop.xlane.xlu0 %1742
      %v1744 = vadd.f32 %v1727, %v1728
      %v1745 = vsel %vm1734, %v1729, 0.0
      %v1746 = vadd.f32 %v1744, %v1745
      %1747 = vadd.xlane.f32.xlu0 %v1746
      %v1748 = vpop.xlane.xlu0 %1747
      %v1749 = vadd.f32 %v1730, %v1731
      %v1750 = vsel %vm1734, %v1732, 0.0
      %v1751 = vadd.f32 %v1749, %v1750
      %1752 = vadd.xlane.f32.xlu0 %v1751
      %v1753 = vpop.xlane.xlu0 %1752
      %vm1754 = vcmask 7168
      %1755 = vst.msk [vmem:[%s291] sm:$0xff] %vm1754, %v1738
      %1756 = vst.msk [vmem:[%s291 + $0x8] sm:$0xff] %vm1754, %v1743
      %1757 = vst.msk [vmem:[%s291 + $0x10] sm:$0xff] %vm1754, %v1748
      %1758 = vst.msk [vmem:[%s291 + $0x18] sm:$0xff] %vm1754, %v1753
      %v1759 = vld [vmem:[%s3] sm:$0xff]
      %v1760 = vld [vmem:[%s3 + $0x8] sm:$0xff]
      %v1761 = vld [vmem:[%s3 + $0x10] sm:$0xff]
      %v1762 = vld [vmem:[%s3 + $0x18] sm:$0xff]
      %v1763 = vld [vmem:[%s3 + $0x20] sm:$0xff]
      %v1764 = vld [vmem:[%s3 + $0x28] sm:$0xff]
      %v1765 = vld [vmem:[%s3 + $0x30] sm:$0xff]
      %v1766 = vld [vmem:[%s3 + $0x38] sm:$0xff]
      %v1767 = vld [vmem:[%s4] sm:$0xff]
      %v1768 = vld [vmem:[%s4 + $0x8] sm:$0xff]
      %v1769 = vld [vmem:[%s4 + $0x10] sm:$0xff]
      %v1770 = vld [vmem:[%s4 + $0x18] sm:$0xff]
      %v1771 = vld [vmem:[%s4 + $0x20] sm:$0xff]
      %v1772 = vld [vmem:[%s4 + $0x28] sm:$0xff]
      %v1773 = vld [vmem:[%s4 + $0x30] sm:$0xff]
      %v1774 = vld [vmem:[%s4 + $0x38] sm:$0xff]
      %v1776 = vsel %vm1734, %v1759, 0
      %v1779 = vsel %vm1734, %v1760, 0
      %v1782 = vsel %vm1734, %v1761, 0
      %v1785 = vsel %vm1734, %v1762, 0
      %v1788 = vsel %vm1734, %v1763, 0
      %v1791 = vsel %vm1734, %v1764, 0
      %v1794 = vsel %vm1734, %v1765, 0
      %v1797 = vsel %vm1734, %v1766, 0
      %1799 = vmatprep.subr.mxu0 0.0
      %1800 = vmatpush1.msra.mxu0 %v1738
      %1801 = vmatprep.subr.mxu0 0.0
      %1802 = vmatpush1.msra.mxu0 %v1743
      %1803 = vmatprep.subr.mxu0 0.0
      %1804 = vmatpush1.msra.mxu0 %v1748
      %1805 = vmatprep.subr.mxu0 0.0
      %1806 = vmatpush1.msra.mxu0 %v1753
      %1807 = vmatprep.subr.mxu0 0.0
      %1808 = vmatpush1.msra.mxu0 0.0
      %1809 = vmatprep.subr.mxu0 0.0
      %1810 = vmatpush1.msra.mxu0 0.0
      %1811 = vmatprep.subr.mxu0 0.0
      %1812 = vmatpush1.msra.mxu0 0.0
      %1813 = vmatprep.subr.mxu0 0.0
      %1814 = vmatpush1.msra.mxu0 0.0
      %1815 = vmatprep.subr.mxu0 0.0
      %1816 = vmatpush1.msra.mxu0 0.0
      %1817 = vmatprep.subr.mxu0 0.0
      %1818 = vmatpush1.msra.mxu0 0.0
      %1819 = vmatprep.subr.mxu0 0.0
      %1820 = vmatpush1.msra.mxu0 0.0
      %1821 = vmatprep.subr.mxu0 0.0
      %1822 = vmatpush1.msra.mxu0 0.0
      %1823 = vmatprep.subr.mxu0 0.0
      %1824 = vmatpush1.msra.mxu0 0.0
      %1825 = vmatprep.subr.mxu0 0.0
      %1826 = vmatpush1.msra.mxu0 0.0
      %1827 = vmatprep.subr.mxu0 0.0
      %1828 = vmatpush1.msra.mxu0 0.0
      %1829 = vmatprep.subr.mxu0 0.0
      %1830 = vmatpush1.msra.mxu0 0.0
      %1831 = vmatprep.subr.mxu0 0.0
      %1832 = vmatpush1.msra.mxu0 0.0
      %1833 = vmatprep.subr.mxu0 0.0
      %1834 = vmatpush1.msra.mxu0 0.0
      %1835 = vmatprep.subr.mxu0 0.0
      %1836 = vmatpush1.msra.mxu0 0.0
      %1837 = vmatprep.subr.mxu0 0.0
      %1838 = vmatpush1.msra.mxu0 0.0
      %1839 = vmatprep.subr.mxu0 0.0
      %1840 = vmatpush1.msra.mxu0 0.0
      %1841 = vmatprep.subr.mxu0 0.0
      %1842 = vmatpush1.msra.mxu0 0.0
      %1843 = vmatprep.subr.mxu0 0.0
      %1844 = vmatpush1.msra.mxu0 0.0
      %1845 = vmatprep.subr.mxu0 0.0
      %1846 = vmatpush1.msra.mxu0 0.0
      %1847 = vmatprep.subr.mxu0 0.0
      %1848 = vmatpush1.msra.mxu0 0.0
      %1849 = vmatprep.subr.mxu0 0.0
      %1850 = vmatpush1.msra.mxu0 0.0
      %1851 = vmatprep.subr.mxu0 0.0
      %1852 = vmatpush1.msra.mxu0 0.0
      %1853 = vmatprep.subr.mxu0 0.0
      %1854 = vmatpush1.msra.mxu0 0.0
      %1855 = vmatprep.subr.mxu0 0.0
      %1856 = vmatpush1.msra.mxu0 0.0
      %1857 = vmatprep.subr.mxu0 0.0
      %1858 = vmatpush1.msra.mxu0 0.0
      %1859 = vmatprep.subr.mxu0 0.0
      %1860 = vmatpush1.msra.mxu0 0.0
      %1861 = vmatprep.subr.mxu0 0.0
      %1862 = vmatpush1.msra.mxu0 0.0
      %1863 = vmatprep.mubr.f32.mxu0 0.0
      %1864 = vmatmul.mubr.f32.gmra.mrb[0].mxu0 %v1776
      %v1865 = vpop.f32.mrb[0].mxu0
      %v1866 = vadd.f32 %v1767, %v1865
      %v1867 = vpop.f32.mrb[0].mxu0
      %1868 = vmatprep.mubr.f32.mxu0 0.0
      %1869 = vmatmul.mubr.f32.gmra.mrb[0].mxu0 %v1779
      %v1870 = vpop.f32.mrb[0].mxu0
      %v1871 = vadd.f32 %v1768, %v1870
      %v1872 = vpop.f32.mrb[0].mxu0
      %1873 = vmatprep.mubr.f32.mxu0 0.0
      %1874 = vmatmul.mubr.f32.gmra.mrb[0].mxu0 %v1782
      %v1875 = vpop.f32.mrb[0].mxu0
      %v1876 = vadd.f32 %v1769, %v1875
      %v1877 = vpop.f32.mrb[0].mxu0
      %1878 = vmatprep.mubr.f32.mxu0 0.0
      %1879 = vmatmul.mubr.f32.gmra.mrb[0].mxu0 %v1785
      %v1880 = vpop.f32.mrb[0].mxu0
      %v1881 = vadd.f32 %v1770, %v1880
      %v1882 = vpop.f32.mrb[0].mxu0
      %1883 = vmatprep.mubr.f32.mxu0 0.0
      %1884 = vmatmul.mubr.f32.gmra.mrb[0].mxu0 %v1788
      %v1885 = vpop.f32.mrb[0].mxu0
      %v1886 = vadd.f32 %v1771, %v1885
      %v1887 = vpop.f32.mrb[0].mxu0
      %1888 = vmatprep.mubr.f32.mxu0 0.0
      %1889 = vmatmul.mubr.f32.gmra.mrb[0].mxu0 %v1791
      %v1890 = vpop.f32.mrb[0].mxu0
      %v1891 = vadd.f32 %v1772, %v1890
      %v1892 = vpop.f32.mrb[0].mxu0
      %1893 = vmatprep.mubr.f32.mxu0 0.0
      %1894 = vmatmul.mubr.f32.gmra.mrb[0].mxu0 %v1794
      %v1895 = vpop.f32.mrb[0].mxu0
      %v1896 = vadd.f32 %v1773, %v1895
      %v1897 = vpop.f32.mrb[0].mxu0
      %1898 = vmatprep.mubr.f32.mxu0 0.0
      %1899 = vmatmul.mubr.f32.gmra.mrb[0].mxu0 %v1797
      %v1900 = vpop.f32.mrb[0].mxu0
      %v1901 = vadd.f32 %v1774, %v1900
      %v1902 = vpop.f32.mrb[0].mxu0
      %1903 = vdwg.mxu0
      %1904 = vst.msk [vmem:[%s286] sm:$0xff] %vm1754, %v1866
      %1905 = vst.msk [vmem:[%s286 + $0x8] sm:$0xff] %vm1754, %v1871
      %1906 = vst.msk [vmem:[%s286 + $0x10] sm:$0xff] %vm1754, %v1876
      %1907 = vst.msk [vmem:[%s286 + $0x18] sm:$0xff] %vm1754, %v1881
      %1908 = vst.msk [vmem:[%s286 + $0x20] sm:$0xff] %vm1754, %v1886
      %1909 = vst.msk [vmem:[%s286 + $0x28] sm:$0xff] %vm1754, %v1891
      %1910 = vst.msk [vmem:[%s286 + $0x30] sm:$0xff] %vm1754, %v1896
      %1911 = vst.msk [vmem:[%s286 + $0x38] sm:$0xff] %vm1754, %v1901
      %p1912 = scmp.lt.s32.totalorder %s19, 1
      %s1913 = scalar_select %p1912, %s19, 1
      %s1914 = smul.addr %s1913, 8
      %s1915 = smul.addr %s1914, 8
      %s1916 = scalar_lea.vmem %s6, %s1915
      %p1917 = scmp.lt.s32.totalorder %s19, 1
      %s1918 = scalar_select %p1917, %s19, 1
      %s1919 = smul.addr %s1918, 4
      %s1920 = smul.addr %s1919, 8
      %s1921 = scalar_lea.vmem %s7, %s1920
      // Predicated region
      $region45: #{i2p_forward.1} parent=43 // pred_check
        %p1922 = pneg %p168
      $region46: #{i2p_forward.1} parent=43 // pred_check_branch
        %1924 = sbr.rel (%p1922) target = $region48
      $region47: #{i2p_forward.1} parent=43 // pred_region
        _
      $region48: #{i2p_forward.1} parent=43 // pred_fallthru
        _
      // Predicated region
      $region49: #{i2p_forward.1} parent=43 // pred_check
        %p1925 = pneg %p194
      $region50: #{i2p_forward.1} parent=43 // pred_check_branch
        %1927 = sbr.rel (%p1925) target = $region52
      $region51: #{i2p_forward.1} parent=43 // pred_region
        _
      $region52: #{i2p_forward.1} parent=43 // pred_fallthru
        _
    $region44: #{i2p_forward.1} parent=5 // pred_fallthru
      _
    %p1928 = scmp.le.s32.totalorder 2, %s14
    // Predicated region
    $region53: #{i2p_forward.1} parent=5 // pred_check
      %p1929 = pneg %p1928
    $region54: #{i2p_forward.1} parent=5 // pred_check_branch
      %1931 = sbr.rel (%p1929) target = $region56
    $region55: #{i2p_forward.1} parent=5 // pred_region
      %s1932 = ssub.s32 %s14, 2
      // Predicated region
      $region57: #{i2p_forward.1} parent=55 // pred_check
        %p1933 = pneg %p174
      $region58: #{i2p_forward.1} parent=55 // pred_check_branch
        %1935 = sbr.rel (%p1933) target = $region60
      $region59: #{i2p_forward.1} parent=55 // pred_region
        %p1936 = scmp.lt.s32.totalorder %s20, 1
        %s1937 = scalar_select %p1936, %s20, 1
        %s1938 = smul.addr %s1937, 8
        %s1939 = smul.addr %s1938, 8
        %s1940 = scalar_lea.vmem %s6, %s1939
      $region60: #{i2p_forward.1} parent=55 // pred_fallthru
        _
      // Predicated region
      $region61: #{i2p_forward.1} parent=55 // pred_check
        %p1941 = pneg %p200
      $region62: #{i2p_forward.1} parent=55 // pred_check_branch
        %1943 = sbr.rel (%p1941) target = $region64
      $region63: #{i2p_forward.1} parent=55 // pred_region
        %p1944 = scmp.lt.s32.totalorder %s20, 1
        %s1945 = scalar_select %p1944, %s20, 1
        %s1946 = smul.addr %s1945, 4
        %s1947 = smul.addr %s1946, 8
        %s1948 = scalar_lea.vmem %s7, %s1947
      $region64: #{i2p_forward.1} parent=55 // pred_fallthru
        _
    $region56: #{i2p_forward.1} parent=5 // pred_fallthru
      _
  $region6: #{i2p_forward.1} parent=0 // loop_footer
    %s18 = sadd.s32 1, %s14
  $region7: #{i2p_forward.1} parent=0 // loop_footer_branch
    %13 = sbr.rel target = $region3
  $region8: #{i2p_forward.1} parent=0 // loop_exit
    _

</llo_original>
